<compile_context>
chip_gen: v7x
topology: tpu7x:2x2x1
jax: 0.10.0
libtpu: 0.0.40
codegen_flags: <defaults>
</compile_context>

<pallas_src>
import functools
import math

import jax
import jax.numpy as jnp
import numpy as np
from jax import lax
from jax.experimental import pallas as pl
from jax.experimental.pallas import tpu as pltpu


def _vmem_limit_bytes():
    """~96 MiB on 128-MiB-VMEM chips (v5e/v6e), ~48 MiB on v7x (64 MiB physical)."""
    try:
        cap = pltpu.get_tpu_info().vmem_capacity_bytes
        return int(max(32 << 20, min(cap - (16 << 20), 96 << 20)))
    except Exception:  # pragma: no cover - conservative fallback
        return 48 << 20


# ----------------------------------------------------------------------------
# Fused per-(query-tile, head) IPA kernel with fused final linear.
# ----------------------------------------------------------------------------
def _ipa_fused_kernel(cfg,
                      pw_ref,     # SMEM (H,)          raw point weights
                      node_ref,   # (TQ, C) f32        node rows (also the residual)
                      nodet_ref,  # (C, N)  bf16       node features transposed (K/V side)
                      wq_ref,     # (H, C, D+3Pq) bf16 [W_q | W_qpts]            (resident)
                      wkt_ref,    # (H, 2D+3Pq+3Pv, C) bf16 [Wk|Wkpts|Wv|Wvpts]^T (resident)
                      web_ref,    # (H, 1, E) f32      edge-bias weight rows      (resident)
                      wf_ref,     # (H, S, C) bf16     per-head final-linear rows (resident)
                      bias_ref,   # (1, C) f32         final-linear bias
                      edge_ref,   # (TQ, N, E) f32     edge features for this query tile
                      rotq_ref,   # (TQ, 9) f32        row-major rotations (query rows)
                      rott_ref,   # (9, N) f32         rotations transposed (key columns)
                      trq_ref,    # (TQ, 3) f32        translations (query rows)
                      trt_ref,    # (3, N) f32         translations transposed
                      out_ref,    # (TQ, C) f32        final output tile
                      acc_ref):   # VMEM (TQ, C) f32   across-head accumulator
    D, Pq, Pv, E = cfg
    f32, bf16 = jnp.float32, jnp.bfloat16
    h = pl.program_id(1)

    mm = lambda a, b: lax.dot_general(a, b, (((1,), (0,)), ((), ())),
                                      preferred_element_type=f32)
    mm_nt = lambda a, b: lax.dot_general(a, b, (((1,), (1,)), ((), ())),
                                         preferred_element_type=f32)

    nodeq = node_ref[...]                              # (TQ, C) f32

    # -- residual + bias seed the across-head accumulator (final linear fused) ----
    @pl.when(h == 0)
    def _init():
        acc_ref[...] = nodeq + bias_ref[...]

    rq = rotq_ref[...]
    rt = rott_ref[...]
    tqx, tqy, tqz = trq_ref[:, 0:1], trq_ref[:, 1:2], trq_ref[:, 2:3]
    ttx, tty, ttz = trt_ref[0:1, :], trt_ref[1:2, :], trt_ref[2:3, :]

    # ---- fused per-head projections (2 MXU calls, bf16 in / f32 accumulate) -----
    qall = mm(nodeq.astype(bf16), wq_ref[h])           # (TQ, D+3Pq)
    sq = qall[:, :D]
    lqx, lqy, lqz = qall[:, D:D + Pq], qall[:, D + Pq:D + 2 * Pq], qall[:, D + 2 * Pq:]

    # TODO(synk): when n_q > 1 the K-side projection below is recomputed per query
    # tile; a per-head precompute pass (or VMEM cache) would remove that redundancy.
    kall = mm(wkt_ref[h], nodet_ref[...])              # (2D+3Pq+3Pv, N)
    skt = kall[:D, :]
    o = D
    lkx, lky, lkz = kall[o:o + Pq, :], kall[o + Pq:o + 2 * Pq, :], kall[o + 2 * Pq:o + 3 * Pq, :]
    o = D + 3 * Pq
    svt = kall[o:o + D, :]
    o = 2 * D + 3 * Pq
    lvx, lvy, lvz = kall[o:o + Pv, :], kall[o + Pv:o + 2 * Pv, :], kall[o + 2 * Pv:, :]

    # ---- scalar attention logits -------------------------------------------------
    logits = mm(sq.astype(bf16), skt.astype(bf16)) * (D ** -0.5)     # (TQ, N)

    # ---- edge attention bias from the resident edge block (no HBM (H,N,N)) ------
    edge_f = edge_ref[...]                              # (TQ, N, E) f32
    web = web_ref[h].reshape(1, 1, E)
    eb = jnp.sum(edge_f * web, axis=-1)                 # (TQ, N)

    # ---- point-distance term (f32 VPU, lane-dense, static unroll over Pq) -------
    gqx = rq[:, 0:1] * lqx + rq[:, 1:2] * lqy + rq[:, 2:3] * lqz + tqx
    gqy = rq[:, 3:4] * lqx + rq[:, 4:5] * lqy + rq[:, 5:6] * lqz + tqy
    gqz = rq[:, 6:7] * lqx + rq[:, 7:8] * lqy + rq[:, 8:9] * lqz + tqz
    gkx = rt[0:1] * lkx + rt[1:2] * lky + rt[2:3] * lkz + ttx
    gky = rt[3:4] * lkx + rt[4:5] * lky + rt[5:6] * lkz + tty
    gkz = rt[6:7] * lkx + rt[7:8] * lky + rt[8:9] * lkz + ttz

    tq_rows, n_keys = logits.shape
    pdist = jnp.zeros((tq_rows, n_keys), f32)
    for p in range(Pq):                                 # Pq is small (4): static unroll
        dx = gqx[:, p:p + 1] - gkx[p:p + 1, :]
        dy = gqy[:, p:p + 1] - gky[p:p + 1, :]
        dz = gqz[:, p:p + 1] - gkz[p:p + 1, :]
        # TODO(synk): no epsilon under the sqrt (torch Vec.dist forward matches);
        # a backward pass at exactly coincident points would need one.
        pdist += jnp.sqrt(dx * dx + dy * dy + dz * dz)

    wc = math.sqrt(2.0 / Pq) / 6.0
    logits = (logits + eb - (wc * pw_ref[h]) * pdist) * (3.0 ** -0.5)

    # ---- softmax over keys, normalization deferred to after the contractions ----
    p_un = jnp.exp(logits - jnp.max(logits, axis=-1, keepdims=True))  # (TQ, N)
    inv_sum = pl.reciprocal(jnp.sum(p_un, axis=-1, keepdims=True), approx=True)
    p_b = p_un.astype(bf16)

    # ---- attended scalar values + value points in one MXU matmul ----------------
    gvx = rt[0:1] * lvx + rt[1:2] * lvy + rt[2:3] * lvz + ttx
    gvy = rt[3:4] * lvx + rt[4:5] * lvy + rt[5:6] * lvz + tty
    gvz = rt[6:7] * lvx + rt[7:8] * lvy + rt[8:9] * lvz + ttz
    av_t = jnp.concatenate([svt, gvx, gvy, gvz], axis=0).astype(bf16)  # (D+3Pv, N)
    av = mm_nt(p_b, av_t) * inv_sum                                    # (TQ, D+3Pv)
    sout = av[:, :D]
    ax, ay, az = av[:, D:D + Pv], av[:, D + Pv:D + 2 * Pv], av[:, D + 2 * Pv:]

    # ---- edge output: batched row contraction on the resident edge block --------
    eout = lax.dot_general(
        p_b[:, None, :], edge_f.astype(bf16),
        dimension_numbers=(((2,), (1,)), ((0,), (0,))),
        preferred_element_type=f32)[:, 0, :] * inv_sum                 # (TQ, E)

    # ---- attended points back to the local frame: R^T (x - T) -------------------
    lx, ly, lz = ax - tqx, ay - tqy, az - tqz
    xloc = rq[:, 0:1] * lx + rq[:, 3:4] * ly + rq[:, 6:7] * lz
    yloc = rq[:, 1:2] * lx + rq[:, 4:5] * ly + rq[:, 7:8] * lz
    zloc = rq[:, 2:3] * lx + rq[:, 5:6] * ly + rq[:, 8:9] * lz
    nrm = jnp.sqrt(xloc * xloc + yloc * yloc + zloc * zloc)

    # ---- fused final linear: accumulate this head's contribution ----------------
    slab = jnp.concatenate([sout, eout, nrm, xloc, yloc, zloc], axis=-1)  # (TQ, S)
    acc_ref[...] += mm(slab.astype(bf16), wf_ref[h])

    @pl.when(h == pl.num_programs(1) - 1)
    def _store():
        out_ref[...] = acc_ref[...]


# ----------------------------------------------------------------------------
# Wrapper: one-time weight re-layout + single pallas_call.
# ----------------------------------------------------------------------------
def _final_row_permutation(H, D, E, Pv):
    """Map the kernel's per-head [scalar|edge|norm|x|y|z] slab columns onto the
    torch concat order [edge (h,e) | scalar (h,d) | vector (h,p,{norm,x,y,z})]."""
    S = D + E + 4 * Pv
    perm = np.zeros((H * S,), dtype=np.int32)
    for h in range(H):
        b = h * S
        perm[b:b + D] = H * E + h * D + np.arange(D)
        perm[b + D:b + D + E] = h * E + np.arange(E)
        for c in range(4):   # norm, x, y, z
            perm[b + D + E + c * Pv: b + D + E + (c + 1) * Pv] = (
                H * E + H * D + h * 4 * Pv + 4 * np.arange(Pv) + c)
    return perm


def ipa_forward_pallas(params, node, edge, R, T, cfg, *, block_q=128):
    H, D = cfg["heads"], cfg["head_dim"]
    Pq, Pv = cfg["n_query_points"], cfg["n_value_points"]
    N, C = node.shape
    E = edge.shape[-1]
    S = D + E + 4 * Pv
    bf16 = jnp.bfloat16

    tq = min(block_q, N)
    assert N % tq == 0 and (tq == N or tq % 8 == 0), \
        "query tile must divide N and be a multiple of 8"
    n_q = N // tq

    # ---- one-time weight re-layout (weight-sized; no activation head transposes) --
    wq, wk, wv = jnp.split(params["w_scalar_qkv"], 3, axis=-1)       # (C, H*D) each
    w_vq, w_vk = jnp.split(params["w_vector_qk"], 2, axis=-1)        # (C, H*Pq*3) each

    w_sq = wq.reshape(C, H, D).transpose(1, 0, 2)                    # (H, C, D)
    w_qp = (w_vq.reshape(C, H, Pq, 3)
            .transpose(1, 0, 3, 2).reshape(H, C, 3 * Pq))            # (H, C, 3Pq) coord-grouped
    w_q_all = jnp.concatenate([w_sq, w_qp], axis=-1).astype(bf16)    # (H, C, D+3Pq)

    w_skt = wk.reshape(C, H, D).transpose(1, 2, 0)                   # (H, D, C)
    w_kpt = (w_vk.reshape(C, H, Pq, 3)
             .transpose(1, 3, 2, 0).reshape(H, 3 * Pq, C))           # (H, 3Pq, C)
    w_svt = wv.reshape(C, H, D).transpose(1, 2, 0)                   # (H, D, C)
    w_vvt = (params["w_vector_v"].reshape(C, H, Pv, 3)
             .transpose(1, 3, 2, 0).reshape(H, 3 * Pv, C))           # (H, 3Pv, C)
    w_k_all = jnp.concatenate([w_skt, w_kpt, w_svt, w_vvt],
                              axis=1).astype(bf16)                   # (H, 2D+3Pq+3Pv, C)

    w_eb = params["w_edge_bias"].T.reshape(H, 1, E)                  # (H, 1, E) f32
    perm = _final_row_permutation(H, D, E, Pv)
    w_f_heads = params["w_final"][perm, :].reshape(H, S, C).astype(bf16)
    b_final = params["b_final"].reshape(1, C)

    # ---- tiny shared activation glue (one small transpose each, shared by heads) --
    node_t = node.T.astype(bf16)                                     # (C, N)
    rot = R.reshape(N, 9)
    rot_t = rot.T                                                    # (9, N)
    trans_t = T.T                                                    # (3, N)

    Kq = D + 3 * Pq
    Kk = 2 * D + 3 * Pq + 3 * Pv

    kernel = functools.partial(_ipa_fused_kernel, (D, Pq, Pv, E))
    in_specs = [
        pl.BlockSpec(memory_space=pltpu.MemorySpace.SMEM),           # point_weight (H,)
        pl.BlockSpec((tq, C), lambda qi, h: (qi, 0)),                # node rows
        pl.BlockSpec((C, N), lambda qi, h: (0, 0)),                  # node^T bf16 (resident)
        pl.BlockSpec((H, C, Kq), lambda qi, h: (0, 0, 0)),           # [Wq|Wqpts]      (resident)
        pl.BlockSpec((H, Kk, C), lambda qi, h: (0, 0, 0)),           # K/V weights^T   (resident)
        pl.BlockSpec((H, 1, E), lambda qi, h: (0, 0, 0)),            # edge-bias W     (resident)
        pl.BlockSpec((H, S, C), lambda qi, h: (0, 0, 0)),            # final linear W  (resident)
        pl.BlockSpec((1, C), lambda qi, h: (0, 0)),                  # final bias
        pl.BlockSpec((tq, N, E), lambda qi, h: (qi, 0, 0)),          # edge features
        pl.BlockSpec((tq, 9), lambda qi, h: (qi, 0)),                # rotations (rows)
        pl.BlockSpec((9, N), lambda qi, h: (0, 0)),                  # rotations^T
        pl.BlockSpec((tq, 3), lambda qi, h: (qi, 0)),                # translations (rows)
        pl.BlockSpec((3, N), lambda qi, h: (0, 0)),                  # translations^T
    ]

    # TODO(synk): for very large N add an in-kernel key tile (flash-style online
    # softmax) so the (tq, N, E) edge block is streamed instead of fully resident.
    return pl.pallas_call(
        kernel,
        grid=(n_q, H),                     # head axis innermost = reduction over heads
        in_specs=in_specs,
        out_specs=pl.BlockSpec((tq, C), lambda qi, h: (qi, 0)),
        out_shape=jax.ShapeDtypeStruct((N, C), jnp.float32),
        scratch_shapes=[pltpu.VMEM((tq, C), jnp.float32)],
        compiler_params=pltpu.CompilerParams(
            dimension_semantics=("parallel", "arbitrary"),
            vmem_limit_bytes=_vmem_limit_bytes()),
    )(params["point_weight"], node, node_t, w_q_all, w_k_all, w_eb,
      w_f_heads, b_final, edge, rot, rot_t, T, trans_t)


# ----------------------------------------------------------------------------
# Pure-JAX reference (mirrors the torch forward) for correctness checking.
# ----------------------------------------------------------------------------
def ipa_forward_reference(params, node, edge, R, T, cfg):
    H, D = cfg["heads"], cfg["head_dim"]
    Pq, Pv = cfg["n_query_points"], cfg["n_value_points"]
    N = node.shape[0]
    E = edge.shape[-1]
    wc = math.sqrt(2.0 / Pq) / 6.0

    sqkv = node @ params["w_scalar_qkv"]
    sq, sk, sv = jnp.split(sqkv, 3, axis=-1)
    sq = sq.reshape(N, H, D).transpose(1, 0, 2)
    sk = sk.reshape(N, H, D).transpose(1, 0, 2)
    sv = sv.reshape(N, H, D).transpose(1, 0, 2)
    node_scalar = jnp.einsum("hid,hjd->hij", sq, sk) * D ** (-0.5)

    eb = jnp.einsum("ije,eh->hij", edge, params["w_edge_bias"])

    vqk = node @ params["w_vector_qk"]
    vq_raw, vk_raw = jnp.split(vqk, 2, axis=-1)
    vq = vq_raw.reshape(N, H, Pq, 3).transpose(1, 0, 2, 3)
    vk = vk_raw.reshape(N, H, Pq, 3).transpose(1, 0, 2, 3)
    to_global = lambda v: jnp.einsum("nab,hnpb->hnpa", R, v) + T[None, :, None, :]
    gq, gk = to_global(vq), to_global(vk)
    dist = jnp.sqrt(jnp.sum((gq[:, :, None] - gk[:, None, :]) ** 2, axis=-1))
    gfd = wc * jnp.sum(dist, axis=-1) * params["point_weight"][:, None, None]

    attn = jax.nn.softmax((node_scalar + eb - gfd) * 3 ** (-0.5), axis=-1)

    edge_out = jnp.einsum("hij,ijd->ihd", attn, edge)
    scalar_out = jnp.einsum("hij,hjd->ihd", attn, sv)

    vv = (node @ params["w_vector_v"]).reshape(N, H, Pv, 3).transpose(1, 0, 2, 3)
    gv = to_global(vv)
    agv = jnp.einsum("hij,hjpa->hipa", attn, gv)
    local = jnp.einsum("nba,hnpb->hnpa", R, agv - T[None, :, None, :])
    nrm = jnp.sqrt(jnp.sum(local ** 2, axis=-1, keepdims=True))
    vec = jnp.concatenate([nrm, local], axis=-1)                      # (H, N, Pv, 4)

    combined = jnp.concatenate([
        edge_out.reshape(N, H * E),
        scalar_out.reshape(N, H * D),
        vec.transpose(1, 0, 2, 3).reshape(N, H * Pv * 4)], axis=-1)
    return node + combined @ params["w_final"] + params["b_final"]


# ----------------------------------------------------------------------------
# Deterministic parameter / input construction.
# ----------------------------------------------------------------------------
def init_params(key, node_dim, edge_dim, H, D, Pq, Pv):
    ks = jax.random.split(key, 6)

    def lin(k, fan_in, fan_out, scale=1.0):
        return (jax.random.normal(k, (fan_in, fan_out), jnp.float32)
                / math.sqrt(fan_in) * scale)

    after = H * edge_dim + H * D + H * Pv * 4
    return dict(
        w_scalar_qkv=lin(ks[0], node_dim, 3 * H * D),
        w_vector_qk=lin(ks[1], node_dim, 2 * 3 * Pq * H),
        w_vector_v=lin(ks[2], node_dim, 3 * Pv * H),
        w_edge_bias=lin(ks[3], edge_dim, H),
        # NOTE: the torch module zero-inits final_linear (output == input); small
        # deterministic random values are used so the kernel compute is observable.
        w_final=lin(ks[4], after, node_dim, scale=0.1),
        b_final=jax.random.normal(ks[5], (node_dim,), jnp.float32) * 0.01,
        # The module applies point_weight raw in forward (no softplus), matching here.
        point_weight=jnp.full((H,), math.log(math.exp(1.0) - 1.0), jnp.float32),
    )


def random_rotations(key, n):
    q = jax.random.normal(key, (n, 4), jnp.float32)
    q = q / jnp.linalg.norm(q, axis=-1, keepdims=True)
    w, x, y, z = q[:, 0], q[:, 1], q[:, 2], q[:, 3]
    R = jnp.stack([
        1 - 2 * (y * y + z * z), 2 * (x * y - z * w), 2 * (x * z + y * w),
        2 * (x * y + z * w), 1 - 2 * (x * x + z * z), 2 * (y * z - x * w),
        2 * (x * z - y * w), 2 * (y * z + x * w), 1 - 2 * (x * x + y * y)],
        axis=-1).reshape(n, 3, 3)
    return R


if __name__ == "__main__":
    N, node_dim, edge_dim = 16, 32, 16
    H, D, Pq, Pv = 4, 16, 4, 8
    cfg = dict(heads=H, head_dim=D, n_query_points=Pq, n_value_points=Pv)

    key = jax.random.PRNGKey(0)
    k1, k2, k3, k4, k5 = jax.random.split(key, 5)
    node = jax.random.normal(k1, (N, node_dim), jnp.float32)
    edge = jax.random.normal(k2, (N, N, edge_dim), jnp.float32)
    R = random_rotations(k3, N)
    T = jax.random.normal(k4, (N, 3), jnp.float32)
    params = init_params(k5, node_dim, edge_dim, H, D, Pq, Pv)

    # block_q=8 exercises the 2-D (query-tile, head) grid and the across-head
    # accumulator at this tiny N; production sizes should use block_q >= 128.
    out = jax.block_until_ready(
        ipa_forward_pallas(params, node, edge, R, T, cfg, block_q=8))
    ref = jax.block_until_ready(ipa_forward_reference(params, node, edge, R, T, cfg))

    assert out.shape == (N, node_dim)
    # bf16 MXU inputs (f32 accumulation) + approx reciprocal give ~1e-3-level drift
    # vs the f32 reference; tolerance sized accordingly.
    if not np.allclose(np.asarray(out), np.asarray(ref), rtol=2e-2, atol=2e-2):
        err = float(jnp.max(jnp.abs(out - ref)))
        raise AssertionError(f"Pallas output mismatch vs reference, max abs err {err}")
    print("KERNEL_OK")
</pallas_src>

<mosaic_0001>
module attributes {stable_mosaic.version = 11 : i64} {
  func.func @_ipa_fused_kernel(%arg0: i32, %arg1: i32, %arg2: memref<4xf32, #tpu.memory_space<smem>>, %arg3: memref<8x32xf32, #tpu.memory_space<vmem>>, %arg4: memref<32x16xbf16, #tpu.memory_space<vmem>>, %arg5: memref<4x32x28xbf16, #tpu.memory_space<vmem>>, %arg6: memref<4x68x32xbf16, #tpu.memory_space<vmem>>, %arg7: memref<4x1x16xf32, #tpu.memory_space<vmem>>, %arg8: memref<4x64x32xbf16, #tpu.memory_space<vmem>>, %arg9: memref<1x32xf32, #tpu.memory_space<vmem>>, %arg10: memref<8x16x16xf32, #tpu.memory_space<vmem>>, %arg11: memref<8x9xf32, #tpu.memory_space<vmem>>, %arg12: memref<9x16xf32, #tpu.memory_space<vmem>>, %arg13: memref<8x3xf32, #tpu.memory_space<vmem>>, %arg14: memref<3x16xf32, #tpu.memory_space<vmem>>, %arg15: memref<8x32xf32, #tpu.memory_space<vmem>>, %arg16: memref<8x32xf32, #tpu.memory_space<vmem>>) attributes {dimension_semantics = [#tpu.dimension_semantics<parallel>, #tpu.dimension_semantics<arbitrary>], iteration_bounds = array<i64: 2, 4>, scalar_prefetch = 0 : i64, scratch_operands = 1 : i64, tpu.core_type = #tpu.core_type<tc>, window_params = [{transform_indices = @transform_0, window_bounds = array<i64: 4>}, {transform_indices = @transform_1, window_bounds = array<i64: 8, 32>}, {pipeline_mode = #tpu.pipeline_mode<synchronous>, transform_indices = @transform_2, window_bounds = array<i64: 32, 16>}, {pipeline_mode = #tpu.pipeline_mode<synchronous>, transform_indices = @transform_3, window_bounds = array<i64: 4, 32, 28>}, {pipeline_mode = #tpu.pipeline_mode<synchronous>, transform_indices = @transform_4, window_bounds = array<i64: 4, 68, 32>}, {pipeline_mode = #tpu.pipeline_mode<synchronous>, transform_indices = @transform_5, window_bounds = array<i64: 4, 1, 16>}, {pipeline_mode = #tpu.pipeline_mode<synchronous>, transform_indices = @transform_6, window_bounds = array<i64: 4, 64, 32>}, {pipeline_mode = #tpu.pipeline_mode<synchronous>, transform_indices = @transform_7, window_bounds = array<i64: 1, 32>}, {transform_indices = @transform_8, window_bounds = array<i64: 8, 16, 16>}, {transform_indices = @transform_9, window_bounds = array<i64: 8, 9>}, {pipeline_mode = #tpu.pipeline_mode<synchronous>, transform_indices = @transform_10, window_bounds = array<i64: 9, 16>}, {transform_indices = @transform_11, window_bounds = array<i64: 8, 3>}, {pipeline_mode = #tpu.pipeline_mode<synchronous>, transform_indices = @transform_12, window_bounds = array<i64: 3, 16>}, {transform_indices = @transform_13, window_bounds = array<i64: 8, 32>}]} {
    %c0 = arith.constant 0 : index
    %c0_0 = arith.constant 0 : index
    %0 = vector.load %arg3[%c0, %c0_0] : memref<8x32xf32, #tpu.memory_space<vmem>>, vector<8x32xf32>
    %c0_i32 = arith.constant 0 : i32
    %1 = arith.cmpi eq, %arg1, %c0_i32 : i32
    %2 = arith.extui %1 : i1 to i32
    %c0_i32_1 = arith.constant 0 : i32
    %3 = arith.cmpi ne, %2, %c0_i32_1 : i32
    scf.if %3 {
      %c0_46 = arith.constant 0 : index
      %c0_47 = arith.constant 0 : index
      %343 = vector.load %arg9[%c0_46, %c0_47] : memref<1x32xf32, #tpu.memory_space<vmem>>, vector<1x32xf32>
      %344 = vector.broadcast %343 : vector<1x32xf32> to vector<8x32xf32>
      %345 = arith.addf %0, %344 : vector<8x32xf32>
      %c0_48 = arith.constant 0 : index
      %c0_49 = arith.constant 0 : index
      %346 = vector.load %arg16[%c0_48, %c0_49] : memref<8x32xf32, #tpu.memory_space<vmem>>, vector<8x32xf32>
      tpu.vector_store %arg16[%c0_48, %c0_49], %345 {strides = array<i32>} : memref<8x32xf32, #tpu.memory_space<vmem>>, vector<8x32xf32>,
    } else {
    }
    %c0_2 = arith.constant 0 : index
    %c0_3 = arith.constant 0 : index
    %4 = vector.load %arg11[%c0_2, %c0_3] : memref<8x9xf32, #tpu.memory_space<vmem>>, vector<8x9xf32>
    %c0_4 = arith.constant 0 : index
    %c0_5 = arith.constant 0 : index
    %5 = vector.load %arg12[%c0_4, %c0_5] : memref<9x16xf32, #tpu.memory_space<vmem>>, vector<9x16xf32>
    %c0_6 = arith.constant 0 : index
    %c0_7 = arith.constant 0 : index
    %6 = vector.load %arg13[%c0_6, %c0_7] : memref<8x3xf32, #tpu.memory_space<vmem>>, vector<8x1xf32>
    %c0_8 = arith.constant 0 : index
    %c1 = arith.constant 1 : index
    %7 = vector.load %arg13[%c0_8, %c1] : memref<8x3xf32, #tpu.memory_space<vmem>>, vector<8x1xf32>
    %c0_9 = arith.constant 0 : index
    %c2 = arith.constant 2 : index
    %8 = vector.load %arg13[%c0_9, %c2] : memref<8x3xf32, #tpu.memory_space<vmem>>, vector<8x1xf32>
    %c0_10 = arith.constant 0 : index
    %c0_11 = arith.constant 0 : index
    %9 = vector.load %arg14[%c0_10, %c0_11] : memref<3x16xf32, #tpu.memory_space<vmem>>, vector<1x16xf32>
    %c1_12 = arith.constant 1 : index
    %c0_13 = arith.constant 0 : index
    %10 = vector.load %arg14[%c1_12, %c0_13] : memref<3x16xf32, #tpu.memory_space<vmem>>, vector<1x16xf32>
    %c2_14 = arith.constant 2 : index
    %c0_15 = arith.constant 0 : index
    %11 = vector.load %arg14[%c2_14, %c0_15] : memref<3x16xf32, #tpu.memory_space<vmem>>, vector<1x16xf32>
    %12 = arith.truncf %0 : vector<8x32xf32> to vector<8x32xbf16>
    %13 = arith.index_cast %arg1 : i32 to index
    %c0_16 = arith.constant 0 : index
    %c0_17 = arith.constant 0 : index
    %14 = vector.load %arg5[%13, %c0_16, %c0_17] : memref<4x32x28xbf16, #tpu.memory_space<vmem>>, vector<1x32x28xbf16>
    %15 = vector.shape_cast %14 : vector<1x32x28xbf16> to vector<32x28xbf16>
    %cst = arith.constant dense<0.000000e+00> : vector<8x28xf32>
    %16 = tpu.matmul %12, %15, %cst {dimension_numbers = #tpu.dot_dimension_numbers<[1], [0], [0], [1], [0, 0, 1, 1], [], []>} : vector<8x32xbf16>, vector<32x28xbf16>, vector<8x28xf32> -> vector<8x28xf32>
    %17 = vector.extract_strided_slice %16 {offsets = [0, 0], sizes = [8, 16], strides = [1, 1]} : vector<8x28xf32> to vector<8x16xf32>
    %18 = vector.extract_strided_slice %16 {offsets = [0, 16], sizes = [8, 4], strides = [1, 1]} : vector<8x28xf32> to vector<8x4xf32>
    %19 = vector.extract_strided_slice %16 {offsets = [0, 20], sizes = [8, 4], strides = [1, 1]} : vector<8x28xf32> to vector<8x4xf32>
    %20 = vector.extract_strided_slice %16 {offsets = [0, 24], sizes = [8, 4], strides = [1, 1]} : vector<8x28xf32> to vector<8x4xf32>
    %21 = arith.index_cast %arg1 : i32 to index
    %c0_18 = arith.constant 0 : index
    %c0_19 = arith.constant 0 : index
    %22 = vector.load %arg6[%21, %c0_18, %c0_19] : memref<4x68x32xbf16, #tpu.memory_space<vmem>>, vector<1x68x32xbf16>
    %23 = vector.shape_cast %22 : vector<1x68x32xbf16> to vector<68x32xbf16>
    %c0_20 = arith.constant 0 : index
    %c0_21 = arith.constant 0 : index
    %24 = vector.load %arg4[%c0_20, %c0_21] : memref<32x16xbf16, #tpu.memory_space<vmem>>, vector<32x16xbf16>
    %cst_22 = arith.constant dense<0.000000e+00> : vector<68x16xf32>
    %25 = tpu.matmul %23, %24, %cst_22 {dimension_numbers = #tpu.dot_dimension_numbers<[1], [0], [0], [1], [0, 0, 1, 1], [], []>} : vector<68x32xbf16>, vector<32x16xbf16>, vector<68x16xf32> -> vector<68x16xf32>
    %26 = vector.extract_strided_slice %25 {offsets = [0, 0], sizes = [16, 16], strides = [1, 1]} : vector<68x16xf32> to vector<16x16xf32>
    %27 = vector.extract_strided_slice %25 {offsets = [16, 0], sizes = [4, 16], strides = [1, 1]} : vector<68x16xf32> to vector<4x16xf32>
    %28 = vector.extract_strided_slice %25 {offsets = [20, 0], sizes = [4, 16], strides = [1, 1]} : vector<68x16xf32> to vector<4x16xf32>
    %29 = vector.extract_strided_slice %25 {offsets = [24, 0], sizes = [4, 16], strides = [1, 1]} : vector<68x16xf32> to vector<4x16xf32>
    %30 = vector.extract_strided_slice %25 {offsets = [28, 0], sizes = [16, 16], strides = [1, 1]} : vector<68x16xf32> to vector<16x16xf32>
    %31 = vector.extract_strided_slice %25 {offsets = [44, 0], sizes = [8, 16], strides = [1, 1]} : vector<68x16xf32> to vector<8x16xf32>
    %32 = vector.extract_strided_slice %25 {offsets = [52, 0], sizes = [8, 16], strides = [1, 1]} : vector<68x16xf32> to vector<8x16xf32>
    %33 = vector.extract_strided_slice %25 {offsets = [60, 0], sizes = [8, 16], strides = [1, 1]} : vector<68x16xf32> to vector<8x16xf32>
    %34 = arith.truncf %17 : vector<8x16xf32> to vector<8x16xbf16>
    %35 = arith.truncf %26 : vector<16x16xf32> to vector<16x16xbf16>
    %cst_23 = arith.constant dense<0.000000e+00> : vector<8x16xf32>
    %36 = tpu.matmul %34, %35, %cst_23 {dimension_numbers = #tpu.dot_dimension_numbers<[1], [0], [0], [1], [0, 0, 1, 1], [], []>} : vector<8x16xbf16>, vector<16x16xbf16>, vector<8x16xf32> -> vector<8x16xf32>
    %cst_24 = arith.constant 2.500000e-01 : f32
    %37 = vector.broadcast %cst_24 : f32 to vector<8x16xf32>
    %38 = arith.mulf %36, %37 : vector<8x16xf32>
    %c0_25 = arith.constant 0 : index
    %c0_26 = arith.constant 0 : index
    %c0_27 = arith.constant 0 : index
    %39 = vector.load %arg10[%c0_25, %c0_26, %c0_27] : memref<8x16x16xf32, #tpu.memory_space<vmem>>, vector<8x16x16xf32>
    %40 = arith.index_cast %arg1 : i32 to index
    %c0_28 = arith.constant 0 : index
    %c0_29 = arith.constant 0 : index
    %41 = vector.load %arg7[%40, %c0_28, %c0_29] : memref<4x1x16xf32, #tpu.memory_space<vmem>>, vector<1x1x16xf32>
    %42 = vector.shape_cast %41 : vector<1x1x16xf32> to vector<1x16xf32>
    %43 = vector.shape_cast %42 : vector<1x16xf32> to vector<1x1x16xf32>
    %44 = vector.broadcast %43 : vector<1x1x16xf32> to vector<8x16x16xf32>
    %45 = arith.mulf %39, %44 : vector<8x16x16xf32>
    %cst_30 = arith.constant dense<0.000000e+00> : vector<8x16xf32>
    %46 = vector.multi_reduction <add>, %45, %cst_30 [2] : vector<8x16x16xf32> to vector<8x16xf32>
    %47 = vector.extract_strided_slice %4 {offsets = [0, 0], sizes = [8, 1], strides = [1, 1]} : vector<8x9xf32> to vector<8x1xf32>
    %48 = vector.broadcast %47 : vector<8x1xf32> to vector<8x4xf32>
    %49 = arith.mulf %48, %18 : vector<8x4xf32>
    %50 = vector.extract_strided_slice %4 {offsets = [0, 1], sizes = [8, 1], strides = [1, 1]} : vector<8x9xf32> to vector<8x1xf32>
    %51 = vector.broadcast %50 : vector<8x1xf32> to vector<8x4xf32>
    %52 = arith.mulf %51, %19 : vector<8x4xf32>
    %53 = arith.addf %49, %52 : vector<8x4xf32>
    %54 = vector.extract_strided_slice %4 {offsets = [0, 2], sizes = [8, 1], strides = [1, 1]} : vector<8x9xf32> to vector<8x1xf32>
    %55 = vector.broadcast %54 : vector<8x1xf32> to vector<8x4xf32>
    %56 = arith.mulf %55, %20 : vector<8x4xf32>
    %57 = arith.addf %53, %56 : vector<8x4xf32>
    %58 = vector.broadcast %6 : vector<8x1xf32> to vector<8x4xf32>
    %59 = arith.addf %57, %58 : vector<8x4xf32>
    %60 = vector.extract_strided_slice %4 {offsets = [0, 3], sizes = [8, 1], strides = [1, 1]} : vector<8x9xf32> to vector<8x1xf32>
    %61 = vector.broadcast %60 : vector<8x1xf32> to vector<8x4xf32>
    %62 = arith.mulf %61, %18 : vector<8x4xf32>
    %63 = vector.extract_strided_slice %4 {offsets = [0, 4], sizes = [8, 1], strides = [1, 1]} : vector<8x9xf32> to vector<8x1xf32>
    %64 = vector.broadcast %63 : vector<8x1xf32> to vector<8x4xf32>
    %65 = arith.mulf %64, %19 : vector<8x4xf32>
    %66 = arith.addf %62, %65 : vector<8x4xf32>
    %67 = vector.extract_strided_slice %4 {offsets = [0, 5], sizes = [8, 1], strides = [1, 1]} : vector<8x9xf32> to vector<8x1xf32>
    %68 = vector.broadcast %67 : vector<8x1xf32> to vector<8x4xf32>
    %69 = arith.mulf %68, %20 : vector<8x4xf32>
    %70 = arith.addf %66, %69 : vector<8x4xf32>
    %71 = vector.broadcast %7 : vector<8x1xf32> to vector<8x4xf32>
    %72 = arith.addf %70, %71 : vector<8x4xf32>
    %73 = vector.extract_strided_slice %4 {offsets = [0, 6], sizes = [8, 1], strides = [1, 1]} : vector<8x9xf32> to vector<8x1xf32>
    %74 = vector.broadcast %73 : vector<8x1xf32> to vector<8x4xf32>
    %75 = arith.mulf %74, %18 : vector<8x4xf32>
    %76 = vector.extract_strided_slice %4 {offsets = [0, 7], sizes = [8, 1], strides = [1, 1]} : vector<8x9xf32> to vector<8x1xf32>
    %77 = vector.broadcast %76 : vector<8x1xf32> to vector<8x4xf32>
    %78 = arith.mulf %77, %19 : vector<8x4xf32>
    %79 = arith.addf %75, %78 : vector<8x4xf32>
    %80 = vector.extract_strided_slice %4 {offsets = [0, 8], sizes = [8, 1], strides = [1, 1]} : vector<8x9xf32> to vector<8x1xf32>
    %81 = vector.broadcast %80 : vector<8x1xf32> to vector<8x4xf32>
    %82 = arith.mulf %81, %20 : vector<8x4xf32>
    %83 = arith.addf %79, %82 : vector<8x4xf32>
    %84 = vector.broadcast %8 : vector<8x1xf32> to vector<8x4xf32>
    %85 = arith.addf %83, %84 : vector<8x4xf32>
    %86 = vector.extract_strided_slice %5 {offsets = [0, 0], sizes = [1, 16], strides = [1, 1]} : vector<9x16xf32> to vector<1x16xf32>
    %87 = vector.broadcast %86 : vector<1x16xf32> to vector<4x16xf32>
    %88 = arith.mulf %87, %27 : vector<4x16xf32>
    %89 = vector.extract_strided_slice %5 {offsets = [1, 0], sizes = [1, 16], strides = [1, 1]} : vector<9x16xf32> to vector<1x16xf32>
    %90 = vector.broadcast %89 : vector<1x16xf32> to vector<4x16xf32>
    %91 = arith.mulf %90, %28 : vector<4x16xf32>
    %92 = arith.addf %88, %91 : vector<4x16xf32>
    %93 = vector.extract_strided_slice %5 {offsets = [2, 0], sizes = [1, 16], strides = [1, 1]} : vector<9x16xf32> to vector<1x16xf32>
    %94 = vector.broadcast %93 : vector<1x16xf32> to vector<4x16xf32>
    %95 = arith.mulf %94, %29 : vector<4x16xf32>
    %96 = arith.addf %92, %95 : vector<4x16xf32>
    %97 = vector.broadcast %9 : vector<1x16xf32> to vector<4x16xf32>
    %98 = arith.addf %96, %97 : vector<4x16xf32>
    %99 = vector.extract_strided_slice %5 {offsets = [3, 0], sizes = [1, 16], strides = [1, 1]} : vector<9x16xf32> to vector<1x16xf32>
    %100 = vector.broadcast %99 : vector<1x16xf32> to vector<4x16xf32>
    %101 = arith.mulf %100, %27 : vector<4x16xf32>
    %102 = vector.extract_strided_slice %5 {offsets = [4, 0], sizes = [1, 16], strides = [1, 1]} : vector<9x16xf32> to vector<1x16xf32>
    %103 = vector.broadcast %102 : vector<1x16xf32> to vector<4x16xf32>
    %104 = arith.mulf %103, %28 : vector<4x16xf32>
    %105 = arith.addf %101, %104 : vector<4x16xf32>
    %106 = vector.extract_strided_slice %5 {offsets = [5, 0], sizes = [1, 16], strides = [1, 1]} : vector<9x16xf32> to vector<1x16xf32>
    %107 = vector.broadcast %106 : vector<1x16xf32> to vector<4x16xf32>
    %108 = arith.mulf %107, %29 : vector<4x16xf32>
    %109 = arith.addf %105, %108 : vector<4x16xf32>
    %110 = vector.broadcast %10 : vector<1x16xf32> to vector<4x16xf32>
    %111 = arith.addf %109, %110 : vector<4x16xf32>
    %112 = vector.extract_strided_slice %5 {offsets = [6, 0], sizes = [1, 16], strides = [1, 1]} : vector<9x16xf32> to vector<1x16xf32>
    %113 = vector.broadcast %112 : vector<1x16xf32> to vector<4x16xf32>
    %114 = arith.mulf %113, %27 : vector<4x16xf32>
    %115 = vector.extract_strided_slice %5 {offsets = [7, 0], sizes = [1, 16], strides = [1, 1]} : vector<9x16xf32> to vector<1x16xf32>
    %116 = vector.broadcast %115 : vector<1x16xf32> to vector<4x16xf32>
    %117 = arith.mulf %116, %28 : vector<4x16xf32>
    %118 = arith.addf %114, %117 : vector<4x16xf32>
    %119 = vector.extract_strided_slice %5 {offsets = [8, 0], sizes = [1, 16], strides = [1, 1]} : vector<9x16xf32> to vector<1x16xf32>
    %120 = vector.broadcast %119 : vector<1x16xf32> to vector<4x16xf32>
    %121 = arith.mulf %120, %29 : vector<4x16xf32>
    %122 = arith.addf %118, %121 : vector<4x16xf32>
    %123 = vector.broadcast %11 : vector<1x16xf32> to vector<4x16xf32>
    %124 = arith.addf %122, %123 : vector<4x16xf32>
    %cst_31 = arith.constant 0.000000e+00 : f32
    %125 = vector.broadcast %cst_31 : f32 to vector<8x16xf32>
    %126 = vector.extract_strided_slice %59 {offsets = [0, 0], sizes = [8, 1], strides = [1, 1]} : vector<8x4xf32> to vector<8x1xf32>
    %127 = vector.extract_strided_slice %98 {offsets = [0, 0], sizes = [1, 16], strides = [1, 1]} : vector<4x16xf32> to vector<1x16xf32>
    %128 = vector.broadcast %126 : vector<8x1xf32> to vector<8x16xf32>
    %129 = vector.broadcast %127 : vector<1x16xf32> to vector<8x16xf32>
    %130 = arith.subf %128, %129 : vector<8x16xf32>
    %131 = vector.extract_strided_slice %72 {offsets = [0, 0], sizes = [8, 1], strides = [1, 1]} : vector<8x4xf32> to vector<8x1xf32>
    %132 = vector.extract_strided_slice %111 {offsets = [0, 0], sizes = [1, 16], strides = [1, 1]} : vector<4x16xf32> to vector<1x16xf32>
    %133 = vector.broadcast %131 : vector<8x1xf32> to vector<8x16xf32>
    %134 = vector.broadcast %132 : vector<1x16xf32> to vector<8x16xf32>
    %135 = arith.subf %133, %134 : vector<8x16xf32>
    %136 = vector.extract_strided_slice %85 {offsets = [0, 0], sizes = [8, 1], strides = [1, 1]} : vector<8x4xf32> to vector<8x1xf32>
    %137 = vector.extract_strided_slice %124 {offsets = [0, 0], sizes = [1, 16], strides = [1, 1]} : vector<4x16xf32> to vector<1x16xf32>
    %138 = vector.broadcast %136 : vector<8x1xf32> to vector<8x16xf32>
    %139 = vector.broadcast %137 : vector<1x16xf32> to vector<8x16xf32>
    %140 = arith.subf %138, %139 : vector<8x16xf32>
    %141 = arith.mulf %130, %130 : vector<8x16xf32>
    %142 = arith.mulf %135, %135 : vector<8x16xf32>
    %143 = arith.addf %141, %142 : vector<8x16xf32>
    %144 = arith.mulf %140, %140 : vector<8x16xf32>
    %145 = arith.addf %143, %144 : vector<8x16xf32>
    %146 = math.sqrt %145 : vector<8x16xf32>
    %147 = arith.addf %125, %146 : vector<8x16xf32>
    %148 = vector.extract_strided_slice %59 {offsets = [0, 1], sizes = [8, 1], strides = [1, 1]} : vector<8x4xf32> to vector<8x1xf32>
    %149 = vector.extract_strided_slice %98 {offsets = [1, 0], sizes = [1, 16], strides = [1, 1]} : vector<4x16xf32> to vector<1x16xf32>
    %150 = vector.broadcast %148 : vector<8x1xf32> to vector<8x16xf32>
    %151 = vector.broadcast %149 : vector<1x16xf32> to vector<8x16xf32>
    %152 = arith.subf %150, %151 : vector<8x16xf32>
    %153 = vector.extract_strided_slice %72 {offsets = [0, 1], sizes = [8, 1], strides = [1, 1]} : vector<8x4xf32> to vector<8x1xf32>
    %154 = vector.extract_strided_slice %111 {offsets = [1, 0], sizes = [1, 16], strides = [1, 1]} : vector<4x16xf32> to vector<1x16xf32>
    %155 = vector.broadcast %153 : vector<8x1xf32> to vector<8x16xf32>
    %156 = vector.broadcast %154 : vector<1x16xf32> to vector<8x16xf32>
    %157 = arith.subf %155, %156 : vector<8x16xf32>
    %158 = vector.extract_strided_slice %85 {offsets = [0, 1], sizes = [8, 1], strides = [1, 1]} : vector<8x4xf32> to vector<8x1xf32>
    %159 = vector.extract_strided_slice %124 {offsets = [1, 0], sizes = [1, 16], strides = [1, 1]} : vector<4x16xf32> to vector<1x16xf32>
    %160 = vector.broadcast %158 : vector<8x1xf32> to vector<8x16xf32>
    %161 = vector.broadcast %159 : vector<1x16xf32> to vector<8x16xf32>
    %162 = arith.subf %160, %161 : vector<8x16xf32>
    %163 = arith.mulf %152, %152 : vector<8x16xf32>
    %164 = arith.mulf %157, %157 : vector<8x16xf32>
    %165 = arith.addf %163, %164 : vector<8x16xf32>
    %166 = arith.mulf %162, %162 : vector<8x16xf32>
    %167 = arith.addf %165, %166 : vector<8x16xf32>
    %168 = math.sqrt %167 : vector<8x16xf32>
    %169 = arith.addf %147, %168 : vector<8x16xf32>
    %170 = vector.extract_strided_slice %59 {offsets = [0, 2], sizes = [8, 1], strides = [1, 1]} : vector<8x4xf32> to vector<8x1xf32>
    %171 = vector.extract_strided_slice %98 {offsets = [2, 0], sizes = [1, 16], strides = [1, 1]} : vector<4x16xf32> to vector<1x16xf32>
    %172 = vector.broadcast %170 : vector<8x1xf32> to vector<8x16xf32>
    %173 = vector.broadcast %171 : vector<1x16xf32> to vector<8x16xf32>
    %174 = arith.subf %172, %173 : vector<8x16xf32>
    %175 = vector.extract_strided_slice %72 {offsets = [0, 2], sizes = [8, 1], strides = [1, 1]} : vector<8x4xf32> to vector<8x1xf32>
    %176 = vector.extract_strided_slice %111 {offsets = [2, 0], sizes = [1, 16], strides = [1, 1]} : vector<4x16xf32> to vector<1x16xf32>
    %177 = vector.broadcast %175 : vector<8x1xf32> to vector<8x16xf32>
    %178 = vector.broadcast %176 : vector<1x16xf32> to vector<8x16xf32>
    %179 = arith.subf %177, %178 : vector<8x16xf32>
    %180 = vector.extract_strided_slice %85 {offsets = [0, 2], sizes = [8, 1], strides = [1, 1]} : vector<8x4xf32> to vector<8x1xf32>
    %181 = vector.extract_strided_slice %124 {offsets = [2, 0], sizes = [1, 16], strides = [1, 1]} : vector<4x16xf32> to vector<1x16xf32>
    %182 = vector.broadcast %180 : vector<8x1xf32> to vector<8x16xf32>
    %183 = vector.broadcast %181 : vector<1x16xf32> to vector<8x16xf32>
    %184 = arith.subf %182, %183 : vector<8x16xf32>
    %185 = arith.mulf %174, %174 : vector<8x16xf32>
    %186 = arith.mulf %179, %179 : vector<8x16xf32>
    %187 = arith.addf %185, %186 : vector<8x16xf32>
    %188 = arith.mulf %184, %184 : vector<8x16xf32>
    %189 = arith.addf %187, %188 : vector<8x16xf32>
    %190 = math.sqrt %189 : vector<8x16xf32>
    %191 = arith.addf %169, %190 : vector<8x16xf32>
    %192 = vector.extract_strided_slice %59 {offsets = [0, 3], sizes = [8, 1], strides = [1, 1]} : vector<8x4xf32> to vector<8x1xf32>
    %193 = vector.extract_strided_slice %98 {offsets = [3, 0], sizes = [1, 16], strides = [1, 1]} : vector<4x16xf32> to vector<1x16xf32>
    %194 = vector.broadcast %192 : vector<8x1xf32> to vector<8x16xf32>
    %195 = vector.broadcast %193 : vector<1x16xf32> to vector<8x16xf32>
    %196 = arith.subf %194, %195 : vector<8x16xf32>
    %197 = vector.extract_strided_slice %72 {offsets = [0, 3], sizes = [8, 1], strides = [1, 1]} : vector<8x4xf32> to vector<8x1xf32>
    %198 = vector.extract_strided_slice %111 {offsets = [3, 0], sizes = [1, 16], strides = [1, 1]} : vector<4x16xf32> to vector<1x16xf32>
    %199 = vector.broadcast %197 : vector<8x1xf32> to vector<8x16xf32>
    %200 = vector.broadcast %198 : vector<1x16xf32> to vector<8x16xf32>
    %201 = arith.subf %199, %200 : vector<8x16xf32>
    %202 = vector.extract_strided_slice %85 {offsets = [0, 3], sizes = [8, 1], strides = [1, 1]} : vector<8x4xf32> to vector<8x1xf32>
    %203 = vector.extract_strided_slice %124 {offsets = [3, 0], sizes = [1, 16], strides = [1, 1]} : vector<4x16xf32> to vector<1x16xf32>
    %204 = vector.broadcast %202 : vector<8x1xf32> to vector<8x16xf32>
    %205 = vector.broadcast %203 : vector<1x16xf32> to vector<8x16xf32>
    %206 = arith.subf %204, %205 : vector<8x16xf32>
    %207 = arith.mulf %196, %196 : vector<8x16xf32>
    %208 = arith.mulf %201, %201 : vector<8x16xf32>
    %209 = arith.addf %207, %208 : vector<8x16xf32>
    %210 = arith.mulf %206, %206 : vector<8x16xf32>
    %211 = arith.addf %209, %210 : vector<8x16xf32>
    %212 = math.sqrt %211 : vector<8x16xf32>
    %213 = arith.addf %191, %212 : vector<8x16xf32>
    %214 = arith.addf %38, %46 : vector<8x16xf32>
    %215 = arith.index_cast %arg1 : i32 to index
    %216 = memref.load %arg2[%215] : memref<4xf32, #tpu.memory_space<smem>>
    %cst_32 = arith.constant 0.117851131 : f32
    %217 = arith.mulf %cst_32, %216 : f32
    %218 = vector.broadcast %217 : f32 to vector<8x16xf32>
    %219 = arith.mulf %218, %213 : vector<8x16xf32>
    %220 = arith.subf %214, %219 : vector<8x16xf32>
    %cst_33 = arith.constant 0.577350259 : f32
    %221 = vector.broadcast %cst_33 : f32 to vector<8x16xf32>
    %222 = arith.mulf %220, %221 : vector<8x16xf32>
    %cst_34 = arith.constant dense<0xFF800000> : vector<8xf32>
    %223 = vector.multi_reduction <maximumf>, %222, %cst_34 [1] : vector<8x16xf32> to vector<8xf32>
    %224 = vector.shape_cast %223 : vector<8xf32> to vector<8x1xf32>
    %225 = vector.broadcast %224 : vector<8x1xf32> to vector<8x16xf32>
    %226 = arith.subf %222, %225 : vector<8x16xf32>
    %227 = math.exp %226 : vector<8x16xf32>
    %cst_35 = arith.constant dense<0.000000e+00> : vector<8xf32>
    %228 = vector.multi_reduction <add>, %227, %cst_35 [1] : vector<8x16xf32> to vector<8xf32>
    %229 = vector.shape_cast %228 : vector<8xf32> to vector<8x1xf32>
    %230 = tpu.reciprocal %229 {approx = true} : vector<8x1xf32> -> vector<8x1xf32>
    %231 = arith.truncf %227 : vector<8x16xf32> to vector<8x16xbf16>
    %232 = vector.extract_strided_slice %5 {offsets = [0, 0], sizes = [1, 16], strides = [1, 1]} : vector<9x16xf32> to vector<1x16xf32>
    %233 = vector.broadcast %232 : vector<1x16xf32> to vector<8x16xf32>
    %234 = arith.mulf %233, %31 : vector<8x16xf32>
    %235 = vector.extract_strided_slice %5 {offsets = [1, 0], sizes = [1, 16], strides = [1, 1]} : vector<9x16xf32> to vector<1x16xf32>
    %236 = vector.broadcast %235 : vector<1x16xf32> to vector<8x16xf32>
    %237 = arith.mulf %236, %32 : vector<8x16xf32>
    %238 = arith.addf %234, %237 : vector<8x16xf32>
    %239 = vector.extract_strided_slice %5 {offsets = [2, 0], sizes = [1, 16], strides = [1, 1]} : vector<9x16xf32> to vector<1x16xf32>
    %240 = vector.broadcast %239 : vector<1x16xf32> to vector<8x16xf32>
    %241 = arith.mulf %240, %33 : vector<8x16xf32>
    %242 = arith.addf %238, %241 : vector<8x16xf32>
    %243 = vector.broadcast %9 : vector<1x16xf32> to vector<8x16xf32>
    %244 = arith.addf %242, %243 : vector<8x16xf32>
    %245 = vector.extract_strided_slice %5 {offsets = [3, 0], sizes = [1, 16], strides = [1, 1]} : vector<9x16xf32> to vector<1x16xf32>
    %246 = vector.broadcast %245 : vector<1x16xf32> to vector<8x16xf32>
    %247 = arith.mulf %246, %31 : vector<8x16xf32>
    %248 = vector.extract_strided_slice %5 {offsets = [4, 0], sizes = [1, 16], strides = [1, 1]} : vector<9x16xf32> to vector<1x16xf32>
    %249 = vector.broadcast %248 : vector<1x16xf32> to vector<8x16xf32>
    %250 = arith.mulf %249, %32 : vector<8x16xf32>
    %251 = arith.addf %247, %250 : vector<8x16xf32>
    %252 = vector.extract_strided_slice %5 {offsets = [5, 0], sizes = [1, 16], strides = [1, 1]} : vector<9x16xf32> to vector<1x16xf32>
    %253 = vector.broadcast %252 : vector<1x16xf32> to vector<8x16xf32>
    %254 = arith.mulf %253, %33 : vector<8x16xf32>
    %255 = arith.addf %251, %254 : vector<8x16xf32>
    %256 = vector.broadcast %10 : vector<1x16xf32> to vector<8x16xf32>
    %257 = arith.addf %255, %256 : vector<8x16xf32>
    %258 = vector.extract_strided_slice %5 {offsets = [6, 0], sizes = [1, 16], strides = [1, 1]} : vector<9x16xf32> to vector<1x16xf32>
    %259 = vector.broadcast %258 : vector<1x16xf32> to vector<8x16xf32>
    %260 = arith.mulf %259, %31 : vector<8x16xf32>
    %261 = vector.extract_strided_slice %5 {offsets = [7, 0], sizes = [1, 16], strides = [1, 1]} : vector<9x16xf32> to vector<1x16xf32>
    %262 = vector.broadcast %261 : vector<1x16xf32> to vector<8x16xf32>
    %263 = arith.mulf %262, %32 : vector<8x16xf32>
    %264 = arith.addf %260, %263 : vector<8x16xf32>
    %265 = vector.extract_strided_slice %5 {offsets = [8, 0], sizes = [1, 16], strides = [1, 1]} : vector<9x16xf32> to vector<1x16xf32>
    %266 = vector.broadcast %265 : vector<1x16xf32> to vector<8x16xf32>
    %267 = arith.mulf %266, %33 : vector<8x16xf32>
    %268 = arith.addf %264, %267 : vector<8x16xf32>
    %269 = vector.broadcast %11 : vector<1x16xf32> to vector<8x16xf32>
    %270 = arith.addf %268, %269 : vector<8x16xf32>
    %271 = tpu.concatenate %30, %244, %257, %270 in 0 : vector<16x16xf32>, vector<8x16xf32>, vector<8x16xf32>, vector<8x16xf32> -> vector<40x16xf32>
    %272 = arith.truncf %271 : vector<40x16xf32> to vector<40x16xbf16>
    %cst_36 = arith.constant dense<0.000000e+00> : vector<8x40xf32>
    %273 = tpu.matmul %231, %272, %cst_36 {dimension_numbers = #tpu.dot_dimension_numbers<[1], [1], [0], [0], [0, 0, 1, 0], [], []>} : vector<8x16xbf16>, vector<40x16xbf16>, vector<8x40xf32> -> vector<8x40xf32>
    %274 = vector.broadcast %230 : vector<8x1xf32> to vector<8x40xf32>
    %275 = arith.mulf %273, %274 : vector<8x40xf32>
    %276 = vector.extract_strided_slice %275 {offsets = [0, 0], sizes = [8, 16], strides = [1, 1]} : vector<8x40xf32> to vector<8x16xf32>
    %277 = vector.extract_strided_slice %275 {offsets = [0, 16], sizes = [8, 8], strides = [1, 1]} : vector<8x40xf32> to vector<8x8xf32>
    %278 = vector.extract_strided_slice %275 {offsets = [0, 24], sizes = [8, 8], strides = [1, 1]} : vector<8x40xf32> to vector<8x8xf32>
    %279 = vector.extract_strided_slice %275 {offsets = [0, 32], sizes = [8, 8], strides = [1, 1]} : vector<8x40xf32> to vector<8x8xf32>
    %280 = vector.shape_cast %231 : vector<8x16xbf16> to vector<8x1x16xbf16>
    %281 = arith.truncf %39 : vector<8x16x16xf32> to vector<8x16x16xbf16>
    %cst_37 = arith.constant dense<0.000000e+00> : vector<8x1x16xf32>
    %282 = tpu.matmul %280, %281, %cst_37 {dimension_numbers = #tpu.dot_dimension_numbers<[2], [1], [1], [2], [0, 0, 0, 1, 1, 2], [0], [0]>} : vector<8x1x16xbf16>, vector<8x16x16xbf16>, vector<8x1x16xf32> -> vector<8x1x16xf32>
    %283 = vector.shape_cast %282 : vector<8x1x16xf32> to vector<8x16xf32>
    %284 = vector.broadcast %230 : vector<8x1xf32> to vector<8x16xf32>
    %285 = arith.mulf %283, %284 : vector<8x16xf32>
    %286 = vector.broadcast %6 : vector<8x1xf32> to vector<8x8xf32>
    %287 = arith.subf %277, %286 : vector<8x8xf32>
    %288 = vector.broadcast %7 : vector<8x1xf32> to vector<8x8xf32>
    %289 = arith.subf %278, %288 : vector<8x8xf32>
    %290 = vector.broadcast %8 : vector<8x1xf32> to vector<8x8xf32>
    %291 = arith.subf %279, %290 : vector<8x8xf32>
    %292 = vector.extract_strided_slice %4 {offsets = [0, 0], sizes = [8, 1], strides = [1, 1]} : vector<8x9xf32> to vector<8x1xf32>
    %293 = vector.broadcast %292 : vector<8x1xf32> to vector<8x8xf32>
    %294 = arith.mulf %293, %287 : vector<8x8xf32>
    %295 = vector.extract_strided_slice %4 {offsets = [0, 3], sizes = [8, 1], strides = [1, 1]} : vector<8x9xf32> to vector<8x1xf32>
    %296 = vector.broadcast %295 : vector<8x1xf32> to vector<8x8xf32>
    %297 = arith.mulf %296, %289 : vector<8x8xf32>
    %298 = arith.addf %294, %297 : vector<8x8xf32>
    %299 = vector.extract_strided_slice %4 {offsets = [0, 6], sizes = [8, 1], strides = [1, 1]} : vector<8x9xf32> to vector<8x1xf32>
    %300 = vector.broadcast %299 : vector<8x1xf32> to vector<8x8xf32>
    %301 = arith.mulf %300, %291 : vector<8x8xf32>
    %302 = arith.addf %298, %301 : vector<8x8xf32>
    %303 = vector.extract_strided_slice %4 {offsets = [0, 1], sizes = [8, 1], strides = [1, 1]} : vector<8x9xf32> to vector<8x1xf32>
    %304 = vector.broadcast %303 : vector<8x1xf32> to vector<8x8xf32>
    %305 = arith.mulf %304, %287 : vector<8x8xf32>
    %306 = vector.extract_strided_slice %4 {offsets = [0, 4], sizes = [8, 1], strides = [1, 1]} : vector<8x9xf32> to vector<8x1xf32>
    %307 = vector.broadcast %306 : vector<8x1xf32> to vector<8x8xf32>
    %308 = arith.mulf %307, %289 : vector<8x8xf32>
    %309 = arith.addf %305, %308 : vector<8x8xf32>
    %310 = vector.extract_strided_slice %4 {offsets = [0, 7], sizes = [8, 1], strides = [1, 1]} : vector<8x9xf32> to vector<8x1xf32>
    %311 = vector.broadcast %310 : vector<8x1xf32> to vector<8x8xf32>
    %312 = arith.mulf %311, %291 : vector<8x8xf32>
    %313 = arith.addf %309, %312 : vector<8x8xf32>
    %314 = vector.extract_strided_slice %4 {offsets = [0, 2], sizes = [8, 1], strides = [1, 1]} : vector<8x9xf32> to vector<8x1xf32>
    %315 = vector.broadcast %314 : vector<8x1xf32> to vector<8x8xf32>
    %316 = arith.mulf %315, %287 : vector<8x8xf32>
    %317 = vector.extract_strided_slice %4 {offsets = [0, 5], sizes = [8, 1], strides = [1, 1]} : vector<8x9xf32> to vector<8x1xf32>
    %318 = vector.broadcast %317 : vector<8x1xf32> to vector<8x8xf32>
    %319 = arith.mulf %318, %289 : vector<8x8xf32>
    %320 = arith.addf %316, %319 : vector<8x8xf32>
    %321 = vector.extract_strided_slice %4 {offsets = [0, 8], sizes = [8, 1], strides = [1, 1]} : vector<8x9xf32> to vector<8x1xf32>
    %322 = vector.broadcast %321 : vector<8x1xf32> to vector<8x8xf32>
    %323 = arith.mulf %322, %291 : vector<8x8xf32>
    %324 = arith.addf %320, %323 : vector<8x8xf32>
    %325 = arith.mulf %302, %302 : vector<8x8xf32>
    %326 = arith.mulf %313, %313 : vector<8x8xf32>
    %327 = arith.addf %325, %326 : vector<8x8xf32>
    %328 = arith.mulf %324, %324 : vector<8x8xf32>
    %329 = arith.addf %327, %328 : vector<8x8xf32>
    %330 = math.sqrt %329 : vector<8x8xf32>
    %331 = tpu.concatenate %276, %285, %330, %302, %313, %324 in 1 : vector<8x16xf32>, vector<8x16xf32>, vector<8x8xf32>, vector<8x8xf32>, vector<8x8xf32>, vector<8x8xf32> -> vector<8x64xf32>
    %c0_38 = arith.constant 0 : index
    %c0_39 = arith.constant 0 : index
    %332 = vector.load %arg16[%c0_38, %c0_39] : memref<8x32xf32, #tpu.memory_space<vmem>>, vector<8x32xf32>
    %333 = arith.truncf %331 : vector<8x64xf32> to vector<8x64xbf16>
    %334 = arith.index_cast %arg1 : i32 to index
    %c0_40 = arith.constant 0 : index
    %c0_41 = arith.constant 0 : index
    %335 = vector.load %arg8[%334, %c0_40, %c0_41] : memref<4x64x32xbf16, #tpu.memory_space<vmem>>, vector<1x64x32xbf16>
    %336 = vector.shape_cast %335 : vector<1x64x32xbf16> to vector<64x32xbf16>
    %cst_42 = arith.constant dense<0.000000e+00> : vector<8x32xf32>
    %337 = tpu.matmul %333, %336, %cst_42 {dimension_numbers = #tpu.dot_dimension_numbers<[1], [0], [0], [1], [0, 0, 1, 1], [], []>} : vector<8x64xbf16>, vector<64x32xbf16>, vector<8x32xf32> -> vector<8x32xf32>
    %338 = arith.addf %332, %337 : vector<8x32xf32>
    %c0_43 = arith.constant 0 : index
    %c0_44 = arith.constant 0 : index
    %339 = vector.load %arg16[%c0_43, %c0_44] : memref<8x32xf32, #tpu.memory_space<vmem>>, vector<8x32xf32>
    tpu.vector_store %arg16[%c0_43, %c0_44], %338 {strides = array<i32>} : memref<8x32xf32, #tpu.memory_space<vmem>>, vector<8x32xf32>,
    %c3_i32 = arith.constant 3 : i32
    %340 = arith.cmpi eq, %arg1, %c3_i32 : i32
    %341 = arith.extui %340 : i1 to i32
    %c0_i32_45 = arith.constant 0 : i32
    %342 = arith.cmpi ne, %341, %c0_i32_45 : i32
    scf.if %342 {
      %c0_46 = arith.constant 0 : index
      %c0_47 = arith.constant 0 : index
      %343 = vector.load %arg16[%c0_46, %c0_47] : memref<8x32xf32, #tpu.memory_space<vmem>>, vector<8x32xf32>
      %c0_48 = arith.constant 0 : index
      %c0_49 = arith.constant 0 : index
      %344 = vector.load %arg15[%c0_48, %c0_49] : memref<8x32xf32, #tpu.memory_space<vmem>>, vector<8x32xf32>
      tpu.vector_store %arg15[%c0_48, %c0_49], %343 {strides = array<i32>} : memref<8x32xf32, #tpu.memory_space<vmem>>, vector<8x32xf32>,
    } else {
    }
    return
  }
  func.func @transform_0(%arg0: i32, %arg1: i32) -> i32 {
    %c0_i32 = arith.constant 0 : i32
    %c0_i32_0 = arith.constant 0 : i32
    return %c0_i32 : i32
  }
  func.func @transform_1(%arg0: i32, %arg1: i32) -> (i32, i32) {
    %c0_i32 = arith.constant 0 : i32
    %c0_i32_0 = arith.constant 0 : i32
    return %arg0, %c0_i32 : i32, i32
  }
  func.func @transform_2(%arg0: i32, %arg1: i32) -> (i32, i32) {
    %c0_i32 = arith.constant 0 : i32
    %c0_i32_0 = arith.constant 0 : i32
    %c0_i32_1 = arith.constant 0 : i32
    return %c0_i32, %c0_i32_0 : i32, i32
  }
  func.func @transform_3(%arg0: i32, %arg1: i32) -> (i32, i32, i32) {
    %c0_i32 = arith.constant 0 : i32
    %c0_i32_0 = arith.constant 0 : i32
    %c0_i32_1 = arith.constant 0 : i32
    %c0_i32_2 = arith.constant 0 : i32
    return %c0_i32, %c0_i32_0, %c0_i32_1 : i32, i32, i32
  }
  func.func @transform_4(%arg0: i32, %arg1: i32) -> (i32, i32, i32) {
    %c0_i32 = arith.constant 0 : i32
    %c0_i32_0 = arith.constant 0 : i32
    %c0_i32_1 = arith.constant 0 : i32
    %c0_i32_2 = arith.constant 0 : i32
    return %c0_i32, %c0_i32_0, %c0_i32_1 : i32, i32, i32
  }
  func.func @transform_5(%arg0: i32, %arg1: i32) -> (i32, i32, i32) {
    %c0_i32 = arith.constant 0 : i32
    %c0_i32_0 = arith.constant 0 : i32
    %c0_i32_1 = arith.constant 0 : i32
    %c0_i32_2 = arith.constant 0 : i32
    return %c0_i32, %c0_i32_0, %c0_i32_1 : i32, i32, i32
  }
  func.func @transform_6(%arg0: i32, %arg1: i32) -> (i32, i32, i32) {
    %c0_i32 = arith.constant 0 : i32
    %c0_i32_0 = arith.constant 0 : i32
    %c0_i32_1 = arith.constant 0 : i32
    %c0_i32_2 = arith.constant 0 : i32
    return %c0_i32, %c0_i32_0, %c0_i32_1 : i32, i32, i32
  }
  func.func @transform_7(%arg0: i32, %arg1: i32) -> (i32, i32) {
    %c0_i32 = arith.constant 0 : i32
    %c0_i32_0 = arith.constant 0 : i32
    %c0_i32_1 = arith.constant 0 : i32
    return %c0_i32, %c0_i32_0 : i32, i32
  }
  func.func @transform_8(%arg0: i32, %arg1: i32) -> (i32, i32, i32) {
    %c0_i32 = arith.constant 0 : i32
    %c0_i32_0 = arith.constant 0 : i32
    %c0_i32_1 = arith.constant 0 : i32
    return %arg0, %c0_i32, %c0_i32_0 : i32, i32, i32
  }
  func.func @transform_9(%arg0: i32, %arg1: i32) -> (i32, i32) {
    %c0_i32 = arith.constant 0 : i32
    %c0_i32_0 = arith.constant 0 : i32
    return %arg0, %c0_i32 : i32, i32
  }
  func.func @transform_10(%arg0: i32, %arg1: i32) -> (i32, i32) {
    %c0_i32 = arith.constant 0 : i32
    %c0_i32_0 = arith.constant 0 : i32
    %c0_i32_1 = arith.constant 0 : i32
    return %c0_i32, %c0_i32_0 : i32, i32
  }
  func.func @transform_11(%arg0: i32, %arg1: i32) -> (i32, i32) {
    %c0_i32 = arith.constant 0 : i32
    %c0_i32_0 = arith.constant 0 : i32
    return %arg0, %c0_i32 : i32, i32
  }
  func.func @transform_12(%arg0: i32, %arg1: i32) -> (i32, i32) {
    %c0_i32 = arith.constant 0 : i32
    %c0_i32_0 = arith.constant 0 : i32
    %c0_i32_1 = arith.constant 0 : i32
    return %c0_i32, %c0_i32_0 : i32, i32
  }
  func.func @transform_13(%arg0: i32, %arg1: i32) -> (i32, i32) {
    %c0_i32 = arith.constant 0 : i32
    %c0_i32_0 = arith.constant 0 : i32
    return %arg0, %c0_i32 : i32, i32
  }
}

</mosaic_0001>

<llo_original>
// kernel: tpu_custom_call.1
$region0: #{tpu_custom_call.1}
  #allocation0 [shape = 'u32[]', space=smem, size = 0x4, offset = 0x4, fixed_abs, tag = 'smem constant byte address 0x4 - core index']
  #allocation1 [shape = 'u32[144,128]{1,0:T(1,128)}', space=vmem, size = 0x12000, scoped, tag = 'internal scratch']
  #allocation2 [shape = 'f32[8,32]{1,0:T(8,128)}', space=vmem, size = 0x1000, scoped, tag = 'scratch operand']
  %s0 = inlined_call_operand.vmem [shape: f32[4], index: 0, kind: input, shape index: {}]
  %s1 = inlined_call_operand.vmem [shape: f32[16,32], index: 1, kind: input, shape index: {}]
  %s2 = inlined_call_operand.vmem [shape: bf16[32,16], index: 2, kind: input, shape index: {}]
  %s3 = inlined_call_operand.vmem [shape: bf16[4,32,28], index: 3, kind: input, shape index: {}]
  %s4 = inlined_call_operand.vmem [shape: bf16[4,68,32], index: 4, kind: input, shape index: {}]
  %s5 = inlined_call_operand.vmem [shape: f32[4,1,16], index: 5, kind: input, shape index: {}]
  %s6 = inlined_call_operand.vmem [shape: bf16[4,64,32], index: 6, kind: input, shape index: {}]
  %s7 = inlined_call_operand.vmem [shape: f32[1,32], index: 7, kind: input, shape index: {}]
  %s8 = inlined_call_operand.vmem [shape: f32[16,16,16], index: 8, kind: input, shape index: {}]
  %s9 = inlined_call_operand.vmem [shape: f32[16,9], index: 9, kind: input, shape index: {}]
  %s10 = inlined_call_operand.vmem [shape: f32[9,16], index: 10, kind: input, shape index: {}]
  %s11 = inlined_call_operand.vmem [shape: f32[16,3], index: 11, kind: input, shape index: {}]
  %s12 = inlined_call_operand.vmem [shape: f32[3,16], index: 12, kind: input, shape index: {}]
  %s13 = inlined_call_operand.hbm [shape: f32[16,32], index: 13, kind: output, shape index: {}]
  %s14 = sld [smem:[#allocation0]]
  $region97: #{tpu_custom_call.1} parent=0
    _
  %s16 = ssub.s32 1, %s14
  %s17 = scalar_select 0, %s16, %s14
  $region1: #{tpu_custom_call.1} parent=0
    #allocation3 [shape = 'u8[512]{0}', space=smem, size = 0x200, scoped, tag = 'input window, operand 0, single buffered']
    #allocation4 [shape = 's32[2]{0}', space=sflag, size = 0x8, scoped, tag = 'scoped memory for tpu_custom_call.1']
    #allocation5 [shape = 's32[2]{0}', space=sflag, size = 0x8, scoped, tag = 'scoped memory for tpu_custom_call.1']
    #allocation6 [shape = 'u8[8192]{0}', space=vmem, size = 0x2000, scoped, tag = 'output window, operand 0']
    %18 = vsyncpa [#allocation5], 0
    %19 = vsyncpa [#allocation4], 0
    %s20 = scalar_lea.sflag [#allocation4], 1
    %21 = vsyncpa %s20, 0
    loop: start=0, step=1, limit=10
    $region2: #{tpu_custom_call.1} parent=1 // loop_pre_header
      _
    $region3: #{tpu_custom_call.1} parent=1 // loop_header
      %s23 = sphi 0, %s27
      %p24 = scmp.ge.s32.totalorder %s23, 10
      %s30 = sphi 0, %s42
      %s31 = sphi 0, %s38
      %s32 = sphi 0, %s30
      %s33 = sphi 0, %s31
      %s34 = sphi 0, %s32
      %s35 = sphi 0, %s33
      %s43 = sphi 0, %s43
      %s45 = sphi 0, %s43
      %s46 = sphi 0, %s45
      %s60 = sphi 0, %s46
      %s66 = sphi 0, %s68
      %s69 = sphi 0, %s66
      %s70 = sphi 0, %s69
      %s86 = sphi 0, %s70
      %s90 = sphi 0, %s90
      %s92 = sphi 0, %s90
      %s93 = sphi 0, %s92
      %s107 = sphi 0, %s93
      %s111 = sphi 0, %s111
      %s113 = sphi 0, %s111
      %s114 = sphi 0, %s113
      %s128 = sphi 0, %s114
      %s132 = sphi 0, %s132
      %s134 = sphi 0, %s132
      %s135 = sphi 0, %s134
      %s149 = sphi 0, %s135
      %s153 = sphi 0, %s153
      %s155 = sphi 0, %s153
      %s156 = sphi 0, %s155
      %s170 = sphi 0, %s156
      %s174 = sphi 0, %s174
      %s176 = sphi 0, %s174
      %s177 = sphi 0, %s176
      %s191 = sphi 0, %s177
      %s195 = sphi 0, %s195
      %s197 = sphi 0, %s195
      %s198 = sphi 0, %s197
      %s212 = sphi 0, %s198
      %s218 = sphi 0, %s220
      %s221 = sphi 0, %s218
      %s222 = sphi 0, %s221
      %s238 = sphi 0, %s222
      %s244 = sphi 0, %s246
      %s247 = sphi 0, %s244
      %s248 = sphi 0, %s247
      %s264 = sphi 0, %s248
      %s268 = sphi 0, %s268
      %s270 = sphi 0, %s268
      %s271 = sphi 0, %s270
      %s285 = sphi 0, %s271
      %s291 = sphi 0, %s293
      %s294 = sphi 0, %s291
      %s295 = sphi 0, %s294
      %s311 = sphi 0, %s295
      %s315 = sphi 0, %s315
      %s317 = sphi 0, %s315
      %s318 = sphi 0, %s317
      %s332 = sphi 0, %s318
      %s338 = sphi 0, %s340
      %s341 = sphi 0, %s338
      %s342 = sphi 0, %s341
      %s358 = sphi 0, %s342
    $region4: #{tpu_custom_call.1} parent=1 // loop_header_branch
      %26 = sbr.rel (%p24) target = $region8
    $region5: #{tpu_custom_call.1} parent=1 // loop_body
      %s28 = ssub.s32 %s23, 1
      %s29 = ssub.s32 %s23, 2
      %s36 = sadd.s32 1, %s31
      %p37 = scmp.ge.s32.totalorder %s36, 4
      %s38 = scalar_select %p37, 0, %s36
      %s39 = sadd.s32 1, %s30
      %s40 = scalar_select %p37, %s39, %s30
      %p41 = scmp.ge.s32.totalorder %s40, 2
      %s42 = scalar_select %p41, 0, %s40
      %s44 = sadd.s32 %s43, 1
      %p47 = scmp.eq.s32.totalorder %s23, 7
      %p48 = scmp.ne.s32.totalorder %s43, %s45
      %p49 = scmp.eq.s32.totalorder %s23, 0
      %p50 = por %p48, %p49
      %p51 = scmp.ne.s32.totalorder %s43, %s45
      %p52 = scmp.eq.s32.totalorder %s28, 7
      %p53 = por %p51, %p52
      %p54 = scmp.ne.s32.totalorder %s45, %s46
      %p55 = scmp.eq.s32.totalorder %s28, 0
      %p56 = por %p54, %p55
      %p57 = scmp.ne.s32.totalorder %s45, %s46
      %p58 = scmp.eq.s32.totalorder %s29, 7
      %p59 = por %p57, %p58
      %p61 = scmp.ne.s32.totalorder %s46, %s60
      %p62 = scmp.eq.s32.totalorder %s29, 0
      %p63 = por %p61, %p62
      %s64 = ssub.s32 %s30, %s42
      %p65 = scmp.eq.s32.totalorder %s64, 0
      %s67 = sadd.s32 %s66, 1
      %s68 = scalar_select %p65, %s66, %s67
      %p71 = pneg %p65
      %p72 = scmp.eq.s32.totalorder %s23, 7
      %p73 = por %p71, %p72
      %p74 = scmp.ne.s32.totalorder %s66, %s69
      %p75 = scmp.eq.s32.totalorder %s23, 0
      %p76 = por %p74, %p75
      %p77 = scmp.ne.s32.totalorder %s66, %s69
      %p78 = scmp.eq.s32.totalorder %s28, 7
      %p79 = por %p77, %p78
      %p80 = scmp.ne.s32.totalorder %s69, %s70
      %p81 = scmp.eq.s32.totalorder %s28, 0
      %p82 = por %p80, %p81
      %p83 = scmp.ne.s32.totalorder %s69, %s70
      %p84 = scmp.eq.s32.totalorder %s29, 7
      %p85 = por %p83, %p84
      %p87 = scmp.ne.s32.totalorder %s70, %s86
      %p88 = scmp.eq.s32.totalorder %s29, 0
      %p89 = por %p87, %p88
      %s91 = sadd.s32 %s90, 1
      %p94 = scmp.eq.s32.totalorder %s23, 7
      %p95 = scmp.ne.s32.totalorder %s90, %s92
      %p96 = scmp.eq.s32.totalorder %s23, 0
      %p97 = por %p95, %p96
      %p98 = scmp.ne.s32.totalorder %s90, %s92
      %p99 = scmp.eq.s32.totalorder %s28, 7
      %p100 = por %p98, %p99
      %p101 = scmp.ne.s32.totalorder %s92, %s93
      %p102 = scmp.eq.s32.totalorder %s28, 0
      %p103 = por %p101, %p102
      %p104 = scmp.ne.s32.totalorder %s92, %s93
      %p105 = scmp.eq.s32.totalorder %s29, 7
      %p106 = por %p104, %p105
      %p108 = scmp.ne.s32.totalorder %s93, %s107
      %p109 = scmp.eq.s32.totalorder %s29, 0
      %p110 = por %p108, %p109
      %s112 = sadd.s32 %s111, 1
      %p115 = scmp.eq.s32.totalorder %s23, 7
      %p116 = scmp.ne.s32.totalorder %s111, %s113
      %p117 = scmp.eq.s32.totalorder %s23, 0
      %p118 = por %p116, %p117
      %p119 = scmp.ne.s32.totalorder %s111, %s113
      %p120 = scmp.eq.s32.totalorder %s28, 7
      %p121 = por %p119, %p120
      %p122 = scmp.ne.s32.totalorder %s113, %s114
      %p123 = scmp.eq.s32.totalorder %s28, 0
      %p124 = por %p122, %p123
      %p125 = scmp.ne.s32.totalorder %s113, %s114
      %p126 = scmp.eq.s32.totalorder %s29, 7
      %p127 = por %p125, %p126
      %p129 = scmp.ne.s32.totalorder %s114, %s128
      %p130 = scmp.eq.s32.totalorder %s29, 0
      %p131 = por %p129, %p130
      %s133 = sadd.s32 %s132, 1
      %p136 = scmp.eq.s32.totalorder %s23, 7
      %p137 = scmp.ne.s32.totalorder %s132, %s134
      %p138 = scmp.eq.s32.totalorder %s23, 0
      %p139 = por %p137, %p138
      %p140 = scmp.ne.s32.totalorder %s132, %s134
      %p141 = scmp.eq.s32.totalorder %s28, 7
      %p142 = por %p140, %p141
      %p143 = scmp.ne.s32.totalorder %s134, %s135
      %p144 = scmp.eq.s32.totalorder %s28, 0
      %p145 = por %p143, %p144
      %p146 = scmp.ne.s32.totalorder %s134, %s135
      %p147 = scmp.eq.s32.totalorder %s29, 7
      %p148 = por %p146, %p147
      %p150 = scmp.ne.s32.totalorder %s135, %s149
      %p151 = scmp.eq.s32.totalorder %s29, 0
      %p152 = por %p150, %p151
      %s154 = sadd.s32 %s153, 1
      %p157 = scmp.eq.s32.totalorder %s23, 7
      %p158 = scmp.ne.s32.totalorder %s153, %s155
      %p159 = scmp.eq.s32.totalorder %s23, 0
      %p160 = por %p158, %p159
      %p161 = scmp.ne.s32.totalorder %s153, %s155
      %p162 = scmp.eq.s32.totalorder %s28, 7
      %p163 = por %p161, %p162
      %p164 = scmp.ne.s32.totalorder %s155, %s156
      %p165 = scmp.eq.s32.totalorder %s28, 0
      %p166 = por %p164, %p165
      %p167 = scmp.ne.s32.totalorder %s155, %s156
      %p168 = scmp.eq.s32.totalorder %s29, 7
      %p169 = por %p167, %p168
      %p171 = scmp.ne.s32.totalorder %s156, %s170
      %p172 = scmp.eq.s32.totalorder %s29, 0
      %p173 = por %p171, %p172
      %s175 = sadd.s32 %s174, 1
      %p178 = scmp.eq.s32.totalorder %s23, 7
      %p179 = scmp.ne.s32.totalorder %s174, %s176
      %p180 = scmp.eq.s32.totalorder %s23, 0
      %p181 = por %p179, %p180
      %p182 = scmp.ne.s32.totalorder %s174, %s176
      %p183 = scmp.eq.s32.totalorder %s28, 7
      %p184 = por %p182, %p183
      %p185 = scmp.ne.s32.totalorder %s176, %s177
      %p186 = scmp.eq.s32.totalorder %s28, 0
      %p187 = por %p185, %p186
      %p188 = scmp.ne.s32.totalorder %s176, %s177
      %p189 = scmp.eq.s32.totalorder %s29, 7
      %p190 = por %p188, %p189
      %p192 = scmp.ne.s32.totalorder %s177, %s191
      %p193 = scmp.eq.s32.totalorder %s29, 0
      %p194 = por %p192, %p193
      %s196 = sadd.s32 %s195, 1
      %p199 = scmp.eq.s32.totalorder %s23, 7
      %p200 = scmp.ne.s32.totalorder %s195, %s197
      %p201 = scmp.eq.s32.totalorder %s23, 0
      %p202 = por %p200, %p201
      %p203 = scmp.ne.s32.totalorder %s195, %s197
      %p204 = scmp.eq.s32.totalorder %s28, 7
      %p205 = por %p203, %p204
      %p206 = scmp.ne.s32.totalorder %s197, %s198
      %p207 = scmp.eq.s32.totalorder %s28, 0
      %p208 = por %p206, %p207
      %p209 = scmp.ne.s32.totalorder %s197, %s198
      %p210 = scmp.eq.s32.totalorder %s29, 7
      %p211 = por %p209, %p210
      %p213 = scmp.ne.s32.totalorder %s198, %s212
      %p214 = scmp.eq.s32.totalorder %s29, 0
      %p215 = por %p213, %p214
      %s216 = ssub.s32 %s30, %s42
      %p217 = scmp.eq.s32.totalorder %s216, 0
      %s219 = sadd.s32 %s218, 1
      %s220 = scalar_select %p217, %s218, %s219
      %p223 = pneg %p217
      %p224 = scmp.eq.s32.totalorder %s23, 7
      %p225 = por %p223, %p224
      %p226 = scmp.ne.s32.totalorder %s218, %s221
      %p227 = scmp.eq.s32.totalorder %s23, 0
      %p228 = por %p226, %p227
      %p229 = scmp.ne.s32.totalorder %s218, %s221
      %p230 = scmp.eq.s32.totalorder %s28, 7
      %p231 = por %p229, %p230
      %p232 = scmp.ne.s32.totalorder %s221, %s222
      %p233 = scmp.eq.s32.totalorder %s28, 0
      %p234 = por %p232, %p233
      %p235 = scmp.ne.s32.totalorder %s221, %s222
      %p236 = scmp.eq.s32.totalorder %s29, 7
      %p237 = por %p235, %p236
      %p239 = scmp.ne.s32.totalorder %s222, %s238
      %p240 = scmp.eq.s32.totalorder %s29, 0
      %p241 = por %p239, %p240
      %s242 = ssub.s32 %s30, %s42
      %p243 = scmp.eq.s32.totalorder %s242, 0
      %s245 = sadd.s32 %s244, 1
      %s246 = scalar_select %p243, %s244, %s245
      %p249 = pneg %p243
      %p250 = scmp.eq.s32.totalorder %s23, 7
      %p251 = por %p249, %p250
      %p252 = scmp.ne.s32.totalorder %s244, %s247
      %p253 = scmp.eq.s32.totalorder %s23, 0
      %p254 = por %p252, %p253
      %p255 = scmp.ne.s32.totalorder %s244, %s247
      %p256 = scmp.eq.s32.totalorder %s28, 7
      %p257 = por %p255, %p256
      %p258 = scmp.ne.s32.totalorder %s247, %s248
      %p259 = scmp.eq.s32.totalorder %s28, 0
      %p260 = por %p258, %p259
      %p261 = scmp.ne.s32.totalorder %s247, %s248
      %p262 = scmp.eq.s32.totalorder %s29, 7
      %p263 = por %p261, %p262
      %p265 = scmp.ne.s32.totalorder %s248, %s264
      %p266 = scmp.eq.s32.totalorder %s29, 0
      %p267 = por %p265, %p266
      %s269 = sadd.s32 %s268, 1
      %p272 = scmp.eq.s32.totalorder %s23, 7
      %p273 = scmp.ne.s32.totalorder %s268, %s270
      %p274 = scmp.eq.s32.totalorder %s23, 0
      %p275 = por %p273, %p274
      %p276 = scmp.ne.s32.totalorder %s268, %s270
      %p277 = scmp.eq.s32.totalorder %s28, 7
      %p278 = por %p276, %p277
      %p279 = scmp.ne.s32.totalorder %s270, %s271
      %p280 = scmp.eq.s32.totalorder %s28, 0
      %p281 = por %p279, %p280
      %p282 = scmp.ne.s32.totalorder %s270, %s271
      %p283 = scmp.eq.s32.totalorder %s29, 7
      %p284 = por %p282, %p283
      %p286 = scmp.ne.s32.totalorder %s271, %s285
      %p287 = scmp.eq.s32.totalorder %s29, 0
      %p288 = por %p286, %p287
      %s289 = ssub.s32 %s30, %s42
      %p290 = scmp.eq.s32.totalorder %s289, 0
      %s292 = sadd.s32 %s291, 1
      %s293 = scalar_select %p290, %s291, %s292
      %p296 = pneg %p290
      %p297 = scmp.eq.s32.totalorder %s23, 7
      %p298 = por %p296, %p297
      %p299 = scmp.ne.s32.totalorder %s291, %s294
      %p300 = scmp.eq.s32.totalorder %s23, 0
      %p301 = por %p299, %p300
      %p302 = scmp.ne.s32.totalorder %s291, %s294
      %p303 = scmp.eq.s32.totalorder %s28, 7
      %p304 = por %p302, %p303
      %p305 = scmp.ne.s32.totalorder %s294, %s295
      %p306 = scmp.eq.s32.totalorder %s28, 0
      %p307 = por %p305, %p306
      %p308 = scmp.ne.s32.totalorder %s294, %s295
      %p309 = scmp.eq.s32.totalorder %s29, 7
      %p310 = por %p308, %p309
      %p312 = scmp.ne.s32.totalorder %s295, %s311
      %p313 = scmp.eq.s32.totalorder %s29, 0
      %p314 = por %p312, %p313
      %s316 = sadd.s32 %s315, 1
      %p319 = scmp.eq.s32.totalorder %s23, 7
      %p320 = scmp.ne.s32.totalorder %s315, %s317
      %p321 = scmp.eq.s32.totalorder %s23, 0
      %p322 = por %p320, %p321
      %p323 = scmp.ne.s32.totalorder %s315, %s317
      %p324 = scmp.eq.s32.totalorder %s28, 7
      %p325 = por %p323, %p324
      %p326 = scmp.ne.s32.totalorder %s317, %s318
      %p327 = scmp.eq.s32.totalorder %s28, 0
      %p328 = por %p326, %p327
      %p329 = scmp.ne.s32.totalorder %s317, %s318
      %p330 = scmp.eq.s32.totalorder %s29, 7
      %p331 = por %p329, %p330
      %p333 = scmp.ne.s32.totalorder %s318, %s332
      %p334 = scmp.eq.s32.totalorder %s29, 0
      %p335 = por %p333, %p334
      %s336 = ssub.s32 %s30, %s42
      %p337 = scmp.eq.s32.totalorder %s336, 0
      %s339 = sadd.s32 %s338, 1
      %s340 = scalar_select %p337, %s338, %s339
      %p343 = pneg %p337
      %p344 = scmp.eq.s32.totalorder %s23, 7
      %p345 = por %p343, %p344
      %p346 = scmp.ne.s32.totalorder %s338, %s341
      %p347 = scmp.eq.s32.totalorder %s23, 0
      %p348 = por %p346, %p347
      %p349 = scmp.ne.s32.totalorder %s338, %s341
      %p350 = scmp.eq.s32.totalorder %s28, 7
      %p351 = por %p349, %p350
      %p352 = scmp.ne.s32.totalorder %s341, %s342
      %p353 = scmp.eq.s32.totalorder %s28, 0
      %p354 = por %p352, %p353
      %p355 = scmp.ne.s32.totalorder %s341, %s342
      %p356 = scmp.eq.s32.totalorder %s29, 7
      %p357 = por %p355, %p356
      %p359 = scmp.ne.s32.totalorder %s342, %s358
      %p360 = scmp.eq.s32.totalorder %s29, 0
      %p361 = por %p359, %p360
      %p362 = scmp.le.s32.totalorder 1, %s23
      %p363 = scmp.lt.s32.totalorder %s23, 9
      %p364 = pnand %p362, %p363
      %p365 = pneg %p364
      // Predicated region
      $region9: #{tpu_custom_call.1} parent=5 // pred_check
        _
      $region10: #{tpu_custom_call.1} parent=5 // pred_check_branch
        %367 = sbr.rel (%p364) target = $region12
      $region11: #{tpu_custom_call.1} parent=5 // pred_region
        %s368 = ssub.s32 %s23, 1
        // Predicated region
        $region13: #{tpu_custom_call.1} parent=11 // pred_check
          %p369 = pneg %p56
        $region14: #{tpu_custom_call.1} parent=11 // pred_check_branch
          %371 = sbr.rel (%p369) target = $region16
        $region15: #{tpu_custom_call.1} parent=11 // pred_region
          %s373 = ssub.s32 16, 16
          %374 = vsyncadd [#allocation5], %s373
          %s376 = sshll.u32 %s0, 4
          %s377 = int_to_ptr.vmem [resolvable:$true] %s376
          %379 = dma.vmem_to_smem %s377, 16, [#allocation3], [#allocation5]
        $region16: #{tpu_custom_call.1} parent=11 // pred_fallthru
          _
        // Predicated region
        $region17: #{tpu_custom_call.1} parent=11 // pred_check
          %p380 = pneg %p103
        $region18: #{tpu_custom_call.1} parent=11 // pred_check_branch
          %382 = sbr.rel (%p380) target = $region20
        $region19: #{tpu_custom_call.1} parent=11 // pred_region
          _
        $region20: #{tpu_custom_call.1} parent=11 // pred_fallthru
          _
        // Predicated region
        $region21: #{tpu_custom_call.1} parent=11 // pred_check
          %p383 = pneg %p124
        $region22: #{tpu_custom_call.1} parent=11 // pred_check_branch
          %385 = sbr.rel (%p383) target = $region24
        $region23: #{tpu_custom_call.1} parent=11 // pred_region
          _
        $region24: #{tpu_custom_call.1} parent=11 // pred_fallthru
          _
        // Predicated region
        $region25: #{tpu_custom_call.1} parent=11 // pred_check
          %p386 = pneg %p145
        $region26: #{tpu_custom_call.1} parent=11 // pred_check_branch
          %388 = sbr.rel (%p386) target = $region28
        $region27: #{tpu_custom_call.1} parent=11 // pred_region
          _
        $region28: #{tpu_custom_call.1} parent=11 // pred_fallthru
          _
        // Predicated region
        $region29: #{tpu_custom_call.1} parent=11 // pred_check
          %p389 = pneg %p166
        $region30: #{tpu_custom_call.1} parent=11 // pred_check_branch
          %391 = sbr.rel (%p389) target = $region32
        $region31: #{tpu_custom_call.1} parent=11 // pred_region
          _
        $region32: #{tpu_custom_call.1} parent=11 // pred_fallthru
          _
        // Predicated region
        $region33: #{tpu_custom_call.1} parent=11 // pred_check
          %p392 = pneg %p187
        $region34: #{tpu_custom_call.1} parent=11 // pred_check_branch
          %394 = sbr.rel (%p392) target = $region36
        $region35: #{tpu_custom_call.1} parent=11 // pred_region
          _
        $region36: #{tpu_custom_call.1} parent=11 // pred_fallthru
          _
        // Predicated region
        $region37: #{tpu_custom_call.1} parent=11 // pred_check
          %p395 = pneg %p208
        $region38: #{tpu_custom_call.1} parent=11 // pred_check_branch
          %397 = sbr.rel (%p395) target = $region40
        $region39: #{tpu_custom_call.1} parent=11 // pred_region
          _
        $region40: #{tpu_custom_call.1} parent=11 // pred_fallthru
          _
        // Predicated region
        $region41: #{tpu_custom_call.1} parent=11 // pred_check
          %p398 = pneg %p281
        $region42: #{tpu_custom_call.1} parent=11 // pred_check_branch
          %400 = sbr.rel (%p398) target = $region44
        $region43: #{tpu_custom_call.1} parent=11 // pred_region
          _
        $region44: #{tpu_custom_call.1} parent=11 // pred_fallthru
          _
        // Predicated region
        $region45: #{tpu_custom_call.1} parent=11 // pred_check
          %p401 = pneg %p328
        $region46: #{tpu_custom_call.1} parent=11 // pred_check_branch
          %403 = sbr.rel (%p401) target = $region48
        $region47: #{tpu_custom_call.1} parent=11 // pred_region
          _
        $region48: #{tpu_custom_call.1} parent=11 // pred_fallthru
          _
      $region12: #{tpu_custom_call.1} parent=5 // pred_fallthru
        _
      %p404 = scmp.lt.s32.totalorder %s23, 8
      // Predicated region
      $region49: #{tpu_custom_call.1} parent=5 // pred_check
        %p405 = pneg %p404
      $region50: #{tpu_custom_call.1} parent=5 // pred_check_branch
        %407 = sbr.rel (%p405) target = $region52
      $region51: #{tpu_custom_call.1} parent=5 // pred_region
        // Predicated region
        $region53: #{tpu_custom_call.1} parent=51 // pred_check
          %p408 = pneg %p76
        $region54: #{tpu_custom_call.1} parent=51 // pred_check_branch
          %410 = sbr.rel (%p408) target = $region56
        $region55: #{tpu_custom_call.1} parent=51 // pred_region
          %p411 = scmp.lt.s32.totalorder %s30, 1
          %s412 = scalar_select %p411, %s30, 1
          %s413 = smul.addr %s412, 8
          %s414 = scalar_lea.vmem %s1, %s413
        $region56: #{tpu_custom_call.1} parent=51 // pred_fallthru
          _
        // Predicated region
        $region57: #{tpu_custom_call.1} parent=51 // pred_check
          %p415 = pneg %p228
        $region58: #{tpu_custom_call.1} parent=51 // pred_check_branch
          %417 = sbr.rel (%p415) target = $region60
        $region59: #{tpu_custom_call.1} parent=51 // pred_region
          %s418 = smul.u32 8, %s30
          %p419 = scmp.lt.s32.totalorder %s418, 15
          %s420 = scalar_select %p419, %s418, 15
          %s421 = smul.addr %s420, 2
          %s422 = smul.addr %s421, 8
          %s423 = scalar_lea.vmem %s8, %s422
          %s424 = smul.u32 8, %s30
        $region60: #{tpu_custom_call.1} parent=51 // pred_fallthru
          _
        // Predicated region
        $region61: #{tpu_custom_call.1} parent=51 // pred_check
          %p425 = pneg %p254
        $region62: #{tpu_custom_call.1} parent=51 // pred_check_branch
          %427 = sbr.rel (%p425) target = $region64
        $region63: #{tpu_custom_call.1} parent=51 // pred_region
          %p428 = scmp.lt.s32.totalorder %s30, 1
          %s429 = scalar_select %p428, %s30, 1
          %s430 = smul.addr %s429, 8
          %s431 = scalar_lea.vmem %s9, %s430
        $region64: #{tpu_custom_call.1} parent=51 // pred_fallthru
          _
        // Predicated region
        $region65: #{tpu_custom_call.1} parent=51 // pred_check
          %p432 = pneg %p301
        $region66: #{tpu_custom_call.1} parent=51 // pred_check_branch
          %434 = sbr.rel (%p432) target = $region68
        $region67: #{tpu_custom_call.1} parent=51 // pred_region
          %p435 = scmp.lt.s32.totalorder %s30, 1
          %s436 = scalar_select %p435, %s30, 1
          %s437 = smul.addr %s436, 8
          %s438 = scalar_lea.vmem %s11, %s437
        $region68: #{tpu_custom_call.1} parent=51 // pred_fallthru
          _
      $region52: #{tpu_custom_call.1} parent=5 // pred_fallthru
        _
      %p439 = scmp.le.s32.totalorder 1, %s23
      %p440 = scmp.lt.s32.totalorder %s23, 9
      %p441 = pnand %p439, %p440
      %p442 = pneg %p441
      // Predicated region
      $region69: #{tpu_custom_call.1} parent=5 // pred_check
        _
      $region70: #{tpu_custom_call.1} parent=5 // pred_check_branch
        %444 = sbr.rel (%p441) target = $region72
      $region71: #{tpu_custom_call.1} parent=5 // pred_region
        %s445 = ssub.s32 %s23, 1
        // Predicated region
        $region73: #{tpu_custom_call.1} parent=71 // pred_check
          %p446 = pneg %p56
        $region74: #{tpu_custom_call.1} parent=71 // pred_check_branch
          %448 = sbr.rel (%p446) target = $region76
        $region75: #{tpu_custom_call.1} parent=71 // pred_region
          %449 = dma.done [#allocation5], 16
        $region76: #{tpu_custom_call.1} parent=71 // pred_fallthru
          _
        %450 = sfence
        %p451 = pneg %p56
        %p452 = pneg %p53
        %p453 = scmp.lt.s32.totalorder %s32, 1
        %s454 = scalar_select %p453, %s32, 1
        %s455 = smul.addr %s454, 8
        %s456 = scalar_lea.vmem %s1, %s455
        %p457 = pneg %p82
        %p458 = pneg %p79
        %p459 = pneg %p103
        %p460 = pneg %p100
        %p461 = pneg %p124
        %p462 = pneg %p121
        %p463 = pneg %p145
        %p464 = pneg %p142
        %p465 = pneg %p166
        %p466 = pneg %p163
        %p467 = pneg %p187
        %p468 = pneg %p184
        %p469 = pneg %p208
        %p470 = pneg %p205
        %s471 = smul.u32 8, %s32
        %p472 = scmp.lt.s32.totalorder %s471, 15
        %s473 = scalar_select %p472, %s471, 15
        %s474 = smul.addr %s473, 2
        %s475 = smul.addr %s474, 8
        %s476 = scalar_lea.vmem %s8, %s475
        %p477 = pneg %p234
        %p478 = pneg %p231
        %p479 = scmp.lt.s32.totalorder %s32, 1
        %s480 = scalar_select %p479, %s32, 1
        %s481 = smul.addr %s480, 8
        %s482 = scalar_lea.vmem %s9, %s481
        %p483 = pneg %p260
        %p484 = pneg %p257
        %p485 = pneg %p281
        %p486 = pneg %p278
        %p487 = scmp.lt.s32.totalorder %s32, 1
        %s488 = scalar_select %p487, %s32, 1
        %s489 = smul.addr %s488, 8
        %s490 = scalar_lea.vmem %s11, %s489
        %p491 = pneg %p307
        %p492 = pneg %p304
        %p493 = pneg %p328
        %p494 = pneg %p325
        %p495 = pneg %p354
        %p496 = pneg %p351
        %s497 = sand.u32 %s341, 1
        %s498 = scalar_lea.sflag [#allocation4], %s497
        %s499 = sand.u32 %s341, 1
        %s500 = smul.addr %s499, 8
        %s501 = scalar_lea.vmem [#allocation6], %s500
        %p502 = scmp.lt.s32.totalorder %s32, 1
        %s503 = scalar_select %p502, %s32, 1
        %s504 = smul.addr %s503, 8
        %s505 = scalar_lea.vmem %s1, %s504
        %s506 = smul.u32 8, %s32
        %p507 = scmp.lt.s32.totalorder %s506, 15
        %s508 = scalar_select %p507, %s506, 15
        %s509 = smul.addr %s508, 2
        %s510 = smul.addr %s509, 8
        %s511 = scalar_lea.vmem %s8, %s510
        %s512 = smul.u32 8, %s32
        %p513 = scmp.lt.s32.totalorder %s32, 1
        %s514 = scalar_select %p513, %s32, 1
        %s515 = smul.addr %s514, 8
        %s516 = scalar_lea.vmem %s9, %s515
        %p517 = scmp.lt.s32.totalorder %s32, 1
        %s518 = scalar_select %p517, %s32, 1
        %s519 = smul.addr %s518, 8
        %s520 = scalar_lea.vmem %s11, %s519
        %v522 = vld [vmem:[%s505] sm:$0xff]
        %p523 = scmp.eq.s32.totalorder %s33, 0
        // Predicated region
        $region77: #{tpu_custom_call.1} parent=71 // pred_check
          %p524 = pneg %p523
        $region78: #{tpu_custom_call.1} parent=71 // pred_check_branch
          %526 = sbr.rel (%p524) target = $region80
        $region79: #{tpu_custom_call.1} parent=71 // pred_region
          %v527 = vld [vmem:[%s7] sm:$0x1]
          %v529 = vlaneseq
          %v530 = vshrl.u32 %v529, 7
          %v531 = vsub.s32 0, %v530
          %v532 = vrot.slane %v527, %v531
          %v534 = vadd.f32 %v522, %v532
          %vm535 = vcmask 261120
          %536 = vst.msk [vmem:[#allocation2] sm:$0xff] %vm535, %v534
        $region80: #{tpu_custom_call.1} parent=71 // pred_fallthru
          _
        %v537 = vld [vmem:[%s516] sm:$0xff]
        %v538 = vld [vmem:[%s10] sm:$0xff]
        %v539 = vld [vmem:[%s10 + $0x8] sm:$0x1]
        %v540 = vld [vmem:[%s520] sm:$0xff]
        %v541 = vld [vmem:[%s12] sm:$0x1]
        %v542 = vld [vmem:[%s12 + $0x1] sm:$0x1]
        %v543 = vld [vmem:[%s12 + $0x2] sm:$0x1]
        %v544 = vpack.c.bf16 %v522, %v522
        %s545 = smul.u32 %s33, 4
        %s546 = smul.addr %s545, 4
        %s547 = scalar_lea.vmem %s3, %s546
        %v548 = vld [vmem:[%s547] sm:$0xf]
        %v549 = vld [vmem:[%s547 + $0x4] sm:$0xf]
        %v550 = vld [vmem:[%s547 + $0x8] sm:$0xf]
        %v551 = vld [vmem:[%s547 + $0xc] sm:$0xf]
        %v556 = vunpack.c.l.b16 %v548
        %v557 = vunpack.c.l.b16 %v549
        %v558 = vunpack.c.l.b16 %v550
        %v559 = vunpack.c.l.b16 %v551
        %v560 = vpack.c.b16 %v557, %v556
        %v561 = vpack.c.b16 %v559, %v558
        %vm564 = vcmask 261120
        %v566 = vsel %vm564, %v544, 0
        %568 = vmatprep.subr.bf16.mxu0 0
        %569 = vmatpush1.bf16.msra.mxu0 %v560
        %570 = vmatprep.subr.bf16.mxu0 0
        %571 = vmatpush1.bf16.msra.mxu0 %v561
        %572 = vmatprep.subr.bf16.mxu0 0
        %573 = vmatpush1.bf16.msra.mxu0 0
        %574 = vmatprep.subr.bf16.mxu0 0
        %575 = vmatpush1.bf16.msra.mxu0 0
        %576 = vmatprep.subr.bf16.mxu0 0
        %577 = vmatpush1.bf16.msra.mxu0 0
        %578 = vmatprep.subr.bf16.mxu0 0
        %579 = vmatpush1.bf16.msra.mxu0 0
        %580 = vmatprep.subr.bf16.mxu0 0
        %581 = vmatpush1.bf16.msra.mxu0 0
        %582 = vmatprep.subr.bf16.mxu0 0
        %583 = vmatpush1.bf16.msra.mxu0 0
        %584 = vmatprep.subr.bf16.mxu0 0
        %585 = vmatpush1.bf16.msra.mxu0 0
        %586 = vmatprep.subr.bf16.mxu0 0
        %587 = vmatpush1.bf16.msra.mxu0 0
        %588 = vmatprep.subr.bf16.mxu0 0
        %589 = vmatpush1.bf16.msra.mxu0 0
        %590 = vmatprep.subr.bf16.mxu0 0
        %591 = vmatpush1.bf16.msra.mxu0 0
        %592 = vmatprep.subr.bf16.mxu0 0
        %593 = vmatpush1.bf16.msra.mxu0 0
        %594 = vmatprep.subr.bf16.mxu0 0
        %595 = vmatpush1.bf16.msra.mxu0 0
        %596 = vmatprep.subr.bf16.mxu0 0
        %597 = vmatpush1.bf16.msra.mxu0 0
        %598 = vmatprep.subr.bf16.mxu0 0
        %599 = vmatpush1.bf16.msra.mxu0 0
        %600 = vmatprep.mubr.bf16.mxu0 0
        %601 = vmatmul.mubr.bf16.gmra.mrb[0].mxu0 %v566
        %v602 = vpop.f32.mrb[0].mxu0
        %v603 = vadd.f32 0.0, %v602
        %v604 = vpop.f32.mrb[0].mxu0
        %v605 = vpop.f32.mrb[0].mxu0
        %v606 = vpop.f32.mrb[0].mxu0
        %607 = vdwg.mxu0
        %s608 = smul.u32 %s33, 9
        %s609 = smul.addr %s608, 4
        %s610 = scalar_lea.vmem %s4, %s609
        %v611 = vld [vmem:[%s610] sm:$0xf]
        %v612 = vld [vmem:[%s610 + $0x4] sm:$0xf]
        %v613 = vld [vmem:[%s610 + $0x8] sm:$0xf]
        %v614 = vld [vmem:[%s610 + $0xc] sm:$0xf]
        %v615 = vld [vmem:[%s610 + $0x10] sm:$0xf]
        %v616 = vld [vmem:[%s610 + $0x14] sm:$0xf]
        %v617 = vld [vmem:[%s610 + $0x18] sm:$0xf]
        %v618 = vld [vmem:[%s610 + $0x1c] sm:$0xf]
        %v619 = vld [vmem:[%s610 + $0x20] sm:$0x3]
        %v620 = vld [vmem:[%s2] sm:$0xf]
        %v621 = vld [vmem:[%s2 + $0x4] sm:$0xf]
        %v622 = vld [vmem:[%s2 + $0x8] sm:$0xf]
        %v623 = vld [vmem:[%s2 + $0xc] sm:$0xf]
        %v633 = vunpack.c.l.b16 %v611
        %v634 = vunpack.c.l.b16 %v612
        %v635 = vunpack.c.l.b16 %v613
        %v636 = vunpack.c.l.b16 %v614
        %v637 = vunpack.c.l.b16 %v615
        %v638 = vunpack.c.l.b16 %v616
        %v639 = vunpack.c.l.b16 %v617
        %v640 = vunpack.c.l.b16 %v618
        %v641 = vunpack.c.l.b16 %v619
        %v642 = vpack.c.b16 %v634, %v633
        %v643 = vpack.c.b16 %v636, %v635
        %v644 = vpack.c.b16 %v638, %v637
        %v645 = vpack.c.b16 %v640, %v639
        %v646 = vpack.c.b16 %v641, %v641
        %v651 = vunpack.c.l.b16 %v620
        %v652 = vunpack.c.l.b16 %v621
        %v653 = vunpack.c.l.b16 %v622
        %v654 = vunpack.c.l.b16 %v623
        %v655 = vpack.c.b16 %v652, %v651
        %v656 = vpack.c.b16 %v654, %v653
        %v660 = vsel %vm564, %v642, 0
        %v663 = vsel %vm564, %v643, 0
        %v666 = vsel %vm564, %v644, 0
        %v669 = vsel %vm564, %v645, 0
        %v672 = vsel %vm564, %v646, 0
        %674 = vmatprep.subr.bf16.mxu0 0
        %675 = vmatpush1.bf16.msra.mxu0 %v655
        %676 = vmatprep.subr.bf16.mxu0 0
        %677 = vmatpush1.bf16.msra.mxu0 %v656
        %678 = vmatprep.subr.bf16.mxu0 0
        %679 = vmatpush1.bf16.msra.mxu0 0
        %680 = vmatprep.subr.bf16.mxu0 0
        %681 = vmatpush1.bf16.msra.mxu0 0
        %682 = vmatprep.subr.bf16.mxu0 0
        %683 = vmatpush1.bf16.msra.mxu0 0
        %684 = vmatprep.subr.bf16.mxu0 0
        %685 = vmatpush1.bf16.msra.mxu0 0
        %686 = vmatprep.subr.bf16.mxu0 0
        %687 = vmatpush1.bf16.msra.mxu0 0
        %688 = vmatprep.subr.bf16.mxu0 0
        %689 = vmatpush1.bf16.msra.mxu0 0
        %690 = vmatprep.subr.bf16.mxu0 0
        %691 = vmatpush1.bf16.msra.mxu0 0
        %692 = vmatprep.subr.bf16.mxu0 0
        %693 = vmatpush1.bf16.msra.mxu0 0
        %694 = vmatprep.subr.bf16.mxu0 0
        %695 = vmatpush1.bf16.msra.mxu0 0
        %696 = vmatprep.subr.bf16.mxu0 0
        %697 = vmatpush1.bf16.msra.mxu0 0
        %698 = vmatprep.subr.bf16.mxu0 0
        %699 = vmatpush1.bf16.msra.mxu0 0
        %700 = vmatprep.subr.bf16.mxu0 0
        %701 = vmatpush1.bf16.msra.mxu0 0
        %702 = vmatprep.subr.bf16.mxu0 0
        %703 = vmatpush1.bf16.msra.mxu0 0
        %704 = vmatprep.subr.bf16.mxu0 0
        %705 = vmatpush1.bf16.msra.mxu0 0
        %706 = vmatprep.mubr.bf16.mxu0 0
        %707 = vmatmul.mubr.bf16.gmra.mrb[0].mxu0 %v660
        %v708 = vpop.f32.mrb[0].mxu0
        %v709 = vadd.f32 0.0, %v708
        %v710 = vpop.f32.mrb[0].mxu0
        %v711 = vpop.f32.mrb[0].mxu0
        %v712 = vadd.f32 0.0, %v711
        %v713 = vpop.f32.mrb[0].mxu0
        %714 = vmatprep.mubr.bf16.mxu0 0
        %715 = vmatmul.mubr.bf16.gmra.mrb[0].mxu0 %v663
        %v716 = vpop.f32.mrb[0].mxu0
        %v717 = vadd.f32 0.0, %v716
        %v718 = vpop.f32.mrb[0].mxu0
        %v719 = vpop.f32.mrb[0].mxu0
        %v720 = vadd.f32 0.0, %v719
        %v721 = vpop.f32.mrb[0].mxu0
        %722 = vmatprep.mubr.bf16.mxu0 0
        %723 = vmatmul.mubr.bf16.gmra.mrb[0].mxu0 %v666
        %v724 = vpop.f32.mrb[0].mxu0
        %v725 = vadd.f32 0.0, %v724
        %v726 = vpop.f32.mrb[0].mxu0
        %v727 = vpop.f32.mrb[0].mxu0
        %v728 = vadd.f32 0.0, %v727
        %v729 = vpop.f32.mrb[0].mxu0
        %730 = vmatprep.mubr.bf16.mxu0 0
        %731 = vmatmul.mubr.bf16.gmra.mrb[0].mxu0 %v669
        %v732 = vpop.f32.mrb[0].mxu0
        %v733 = vadd.f32 0.0, %v732
        %v734 = vpop.f32.mrb[0].mxu0
        %v735 = vpop.f32.mrb[0].mxu0
        %v736 = vadd.f32 0.0, %v735
        %v737 = vpop.f32.mrb[0].mxu0
        %738 = vmatprep.mubr.bf16.mxu0 0
        %739 = vmatmul.mubr.bf16.gmra.mrb[0].mxu0 %v672
        %v740 = vpop.f32.mrb[0].mxu0
        %v741 = vadd.f32 0.0, %v740
        %v742 = vpop.f32.mrb[0].mxu0
        %v743 = vpop.f32.mrb[0].mxu0
        %v744 = vpop.f32.mrb[0].mxu0
        %745 = vdwg.mxu0
        %v746 = vpack.c.bf16 %v603, %v603
        %v747 = vpack.c.bf16 %v712, %v709
        %vm748 = vcmask 130048
        %v750 = vsel %vm748, %v746, 0
        %752 = vmatprep.subr.bf16.mxu0 0
        %753 = vmatpush1.bf16.msra.mxu0 %v747
        %754 = vmatprep.subr.bf16.mxu0 0
        %755 = vmatpush1.bf16.msra.mxu0 0
        %756 = vmatprep.subr.bf16.mxu0 0
        %757 = vmatpush1.bf16.msra.mxu0 0
        %758 = vmatprep.subr.bf16.mxu0 0
        %759 = vmatpush1.bf16.msra.mxu0 0
        %760 = vmatprep.subr.bf16.mxu0 0
        %761 = vmatpush1.bf16.msra.mxu0 0
        %762 = vmatprep.subr.bf16.mxu0 0
        %763 = vmatpush1.bf16.msra.mxu0 0
        %764 = vmatprep.subr.bf16.mxu0 0
        %765 = vmatpush1.bf16.msra.mxu0 0
        %766 = vmatprep.subr.bf16.mxu0 0
        %767 = vmatpush1.bf16.msra.mxu0 0
        %768 = vmatprep.subr.bf16.mxu0 0
        %769 = vmatpush1.bf16.msra.mxu0 0
        %770 = vmatprep.subr.bf16.mxu0 0
        %771 = vmatpush1.bf16.msra.mxu0 0
        %772 = vmatprep.subr.bf16.mxu0 0
        %773 = vmatpush1.bf16.msra.mxu0 0
        %774 = vmatprep.subr.bf16.mxu0 0
        %775 = vmatpush1.bf16.msra.mxu0 0
        %776 = vmatprep.subr.bf16.mxu0 0
        %777 = vmatpush1.bf16.msra.mxu0 0
        %778 = vmatprep.subr.bf16.mxu0 0
        %779 = vmatpush1.bf16.msra.mxu0 0
        %780 = vmatprep.subr.bf16.mxu0 0
        %781 = vmatpush1.bf16.msra.mxu0 0
        %782 = vmatprep.subr.bf16.mxu0 0
        %783 = vmatpush1.bf16.msra.mxu0 0
        %784 = vmatprep.mubr.bf16.mxu0 0
        %785 = vmatmul.mubr.bf16.gmra.mrb[0].mxu0 %v750
        %v786 = vpop.f32.mrb[0].mxu0
        %v787 = vadd.f32 0.0, %v786
        %v788 = vpop.f32.mrb[0].mxu0
        %v789 = vpop.f32.mrb[0].mxu0
        %v790 = vpop.f32.mrb[0].mxu0
        %791 = vdwg.mxu0
        %v792 = vmul.f32 %v787, 0.25
        %v793 = vld [vmem:[%s511] sm:$0xff]
        %v794 = vld [vmem:[%s511 + $0x8] sm:$0xff]
        %v795 = vld [vmem:[%s511 + $0x10] sm:$0xff]
        %v796 = vld [vmem:[%s511 + $0x18] sm:$0xff]
        %v797 = vld [vmem:[%s511 + $0x20] sm:$0xff]
        %v798 = vld [vmem:[%s511 + $0x28] sm:$0xff]
        %v799 = vld [vmem:[%s511 + $0x30] sm:$0xff]
        %v800 = vld [vmem:[%s511 + $0x38] sm:$0xff]
        %v801 = vld [vmem:[%s511 + $0x40] sm:$0xff]
        %v802 = vld [vmem:[%s511 + $0x48] sm:$0xff]
        %v803 = vld [vmem:[%s511 + $0x50] sm:$0xff]
        %v804 = vld [vmem:[%s511 + $0x58] sm:$0xff]
        %v805 = vld [vmem:[%s511 + $0x60] sm:$0xff]
        %v806 = vld [vmem:[%s511 + $0x68] sm:$0xff]
        %v807 = vld [vmem:[%s511 + $0x70] sm:$0xff]
        %v808 = vld [vmem:[%s511 + $0x78] sm:$0xff]
        %s809 = scalar_lea.vmem %s5, %s33
        %v810 = vld [vmem:[%s809] sm:$0x1]
        %v812 = vlaneseq
        %v813 = vshrl.u32 %v812, 7
        %v814 = vsub.s32 0, %v813
        %v815 = vrot.slane %v810, %v814
        %v817 = vmul.f32 %v793, %v815
        %v818 = vmul.f32 %v794, %v815
        %v819 = vmul.f32 %v795, %v815
        %v820 = vmul.f32 %v796, %v815
        %v821 = vmul.f32 %v797, %v815
        %v822 = vmul.f32 %v798, %v815
        %v823 = vmul.f32 %v799, %v815
        %v824 = vmul.f32 %v800, %v815
        %v825 = vmul.f32 %v801, %v815
        %v826 = vmul.f32 %v802, %v815
        %v827 = vmul.f32 %v803, %v815
        %v828 = vmul.f32 %v804, %v815
        %v829 = vmul.f32 %v805, %v815
        %v830 = vmul.f32 %v806, %v815
        %v831 = vmul.f32 %v807, %v815
        %v832 = vmul.f32 %v808, %v815
        %v833 = vsel %vm748, %v817, 0.0
        %834 = vadd.xlane.f32.xlu0 %v833
        %v835 = vpop.xlane.xlu0 %834
        %v836 = vsel %vm748, %v818, 0.0
        %837 = vadd.xlane.f32.xlu0 %v836
        %v838 = vpop.xlane.xlu0 %837
        %v839 = vsel %vm748, %v819, 0.0
        %840 = vadd.xlane.f32.xlu0 %v839
        %v841 = vpop.xlane.xlu0 %840
        %v842 = vsel %vm748, %v820, 0.0
        %843 = vadd.xlane.f32.xlu0 %v842
        %v844 = vpop.xlane.xlu0 %843
        %v845 = vsel %vm748, %v821, 0.0
        %846 = vadd.xlane.f32.xlu0 %v845
        %v847 = vpop.xlane.xlu0 %846
        %v848 = vsel %vm748, %v822, 0.0
        %849 = vadd.xlane.f32.xlu0 %v848
        %v850 = vpop.xlane.xlu0 %849
        %v851 = vsel %vm748, %v823, 0.0
        %852 = vadd.xlane.f32.xlu0 %v851
        %v853 = vpop.xlane.xlu0 %852
        %v854 = vsel %vm748, %v824, 0.0
        %855 = vadd.xlane.f32.xlu0 %v854
        %v856 = vpop.xlane.xlu0 %855
        %v857 = vsel %vm748, %v825, 0.0
        %858 = vadd.xlane.f32.xlu0 %v857
        %v859 = vpop.xlane.xlu0 %858
        %v860 = vsel %vm748, %v826, 0.0
        %861 = vadd.xlane.f32.xlu0 %v860
        %v862 = vpop.xlane.xlu0 %861
        %v863 = vsel %vm748, %v827, 0.0
        %864 = vadd.xlane.f32.xlu0 %v863
        %v865 = vpop.xlane.xlu0 %864
        %v866 = vsel %vm748, %v828, 0.0
        %867 = vadd.xlane.f32.xlu0 %v866
        %v868 = vpop.xlane.xlu0 %867
        %v869 = vsel %vm748, %v829, 0.0
        %870 = vadd.xlane.f32.xlu0 %v869
        %v871 = vpop.xlane.xlu0 %870
        %v872 = vsel %vm748, %v830, 0.0
        %873 = vadd.xlane.f32.xlu0 %v872
        %v874 = vpop.xlane.xlu0 %873
        %v875 = vsel %vm748, %v831, 0.0
        %876 = vadd.xlane.f32.xlu0 %v875
        %v877 = vpop.xlane.xlu0 %876
        %v878 = vsel %vm748, %v832, 0.0
        %879 = vadd.xlane.f32.xlu0 %v878
        %v880 = vpop.xlane.xlu0 %879
        %882 = vset.pattern.permute.xlu0 0
        %883 = vperm.xlu0 %882, %v537
        %v884 = vpop.permute.xlu0 %883
        %v886 = vmul.f32 %v884, %v603
        %887 = vset.pattern.permute.xlu0 1
        %888 = vperm.xlu0 %887, %v537
        %v889 = vpop.permute.xlu0 %888
        %v891 = vmul.f32 %v889, %v603
        %893 = vrot.lane.b32.xlu0 %v891, 124
        %v894 = vpop.permute.xlu0 %893
        %v896 = vadd.f32 %v886, %v894
        %897 = vset.pattern.permute.xlu0 2
        %898 = vperm.xlu0 %897, %v537
        %v899 = vpop.permute.xlu0 %898
        %v901 = vmul.f32 %v899, %v603
        %903 = vrot.lane.b32.xlu0 %v901, 120
        %v904 = vpop.permute.xlu0 %903
        %v906 = vadd.f32 %v896, %v904
        %908 = vset.pattern.permute.xlu0 0
        %909 = vperm.xlu0 %908, %v540
        %v910 = vpop.permute.xlu0 %909
        %v912 = vadd.f32 %v906, %v910
        %913 = vset.pattern.permute.xlu0 3
        %914 = vperm.xlu0 %913, %v537
        %v915 = vpop.permute.xlu0 %914
        %v917 = vmul.f32 %v915, %v603
        %918 = vset.pattern.permute.xlu0 4
        %919 = vperm.xlu0 %918, %v537
        %v920 = vpop.permute.xlu0 %919
        %v922 = vmul.f32 %v920, %v603
        %924 = vrot.lane.b32.xlu0 %v922, 124
        %v925 = vpop.permute.xlu0 %924
        %v927 = vadd.f32 %v917, %v925
        %928 = vset.pattern.permute.xlu0 5
        %929 = vperm.xlu0 %928, %v537
        %v930 = vpop.permute.xlu0 %929
        %v932 = vmul.f32 %v930, %v603
        %934 = vrot.lane.b32.xlu0 %v932, 120
        %v935 = vpop.permute.xlu0 %934
        %v937 = vadd.f32 %v927, %v935
        %938 = vset.pattern.permute.xlu0 1
        %939 = vperm.xlu0 %938, %v540
        %v940 = vpop.permute.xlu0 %939
        %v942 = vadd.f32 %v937, %v940
        %943 = vset.pattern.permute.xlu0 6
        %944 = vperm.xlu0 %943, %v537
        %v945 = vpop.permute.xlu0 %944
        %v947 = vmul.f32 %v945, %v603
        %948 = vset.pattern.permute.xlu0 7
        %949 = vperm.xlu0 %948, %v537
        %v950 = vpop.permute.xlu0 %949
        %v952 = vmul.f32 %v950, %v603
        %954 = vrot.lane.b32.xlu0 %v952, 124
        %v955 = vpop.permute.xlu0 %954
        %v957 = vadd.f32 %v947, %v955
        %958 = vset.pattern.permute.xlu0 8
        %959 = vperm.xlu0 %958, %v537
        %v960 = vpop.permute.xlu0 %959
        %v962 = vmul.f32 %v960, %v603
        %964 = vrot.lane.b32.xlu0 %v962, 120
        %v965 = vpop.permute.xlu0 %964
        %v967 = vadd.f32 %v957, %v965
        %968 = vset.pattern.permute.xlu0 2
        %969 = vperm.xlu0 %968, %v540
        %v970 = vpop.permute.xlu0 %969
        %v972 = vadd.f32 %v967, %v970
        %v973 = vlaneseq
        %v974 = vshrl.u32 %v973, 7
        %v975 = vsub.s32 0, %v974
        %v976 = vrot.slane %v538, %v975
        %v977 = vmul.f32 %v976, %v717
        %v978 = vlaneseq
        %v979 = vshrl.u32 %v978, 7
        %v980 = vsub.s32 1, %v979
        %v981 = vrot.slane %v538, %v980
        %v982 = vmul.f32 %v981, %v717
        %v984 = vrot.slane %v982, 4
        %v986 = vadd.f32 %v977, %v984
        %v987 = vlaneseq
        %v988 = vshrl.u32 %v987, 7
        %v989 = vsub.s32 2, %v988
        %v990 = vrot.slane %v538, %v989
        %v991 = vmul.f32 %v990, %v720
        %v992 = vadd.f32 %v986, %v991
        %v993 = vlaneseq
        %v994 = vshrl.u32 %v993, 7
        %v995 = vsub.s32 0, %v994
        %v996 = vrot.slane %v541, %v995
        %v997 = vadd.f32 %v992, %v996
        %v998 = vlaneseq
        %v999 = vshrl.u32 %v998, 7
        %v1000 = vsub.s32 3, %v999
        %v1001 = vrot.slane %v538, %v1000
        %v1002 = vmul.f32 %v1001, %v717
        %v1003 = vlaneseq
        %v1004 = vshrl.u32 %v1003, 7
        %v1005 = vsub.s32 4, %v1004
        %v1006 = vrot.slane %v538, %v1005
        %v1007 = vmul.f32 %v1006, %v717
        %v1009 = vrot.slane %v1007, 4
        %v1011 = vadd.f32 %v1002, %v1009
        %v1012 = vlaneseq
        %v1013 = vshrl.u32 %v1012, 7
        %v1014 = vsub.s32 5, %v1013
        %v1015 = vrot.slane %v538, %v1014
        %v1016 = vmul.f32 %v1015, %v720
        %v1017 = vadd.f32 %v1011, %v1016
        %v1018 = vlaneseq
        %v1019 = vshrl.u32 %v1018, 7
        %v1020 = vsub.s32 0, %v1019
        %v1021 = vrot.slane %v542, %v1020
        %v1022 = vadd.f32 %v1017, %v1021
        %v1023 = vlaneseq
        %v1024 = vshrl.u32 %v1023, 7
        %v1025 = vsub.s32 6, %v1024
        %v1026 = vrot.slane %v538, %v1025
        %v1027 = vmul.f32 %v1026, %v717
        %v1028 = vlaneseq
        %v1029 = vshrl.u32 %v1028, 7
        %v1030 = vsub.s32 7, %v1029
        %v1031 = vrot.slane %v538, %v1030
        %v1032 = vmul.f32 %v1031, %v717
        %v1034 = vrot.slane %v1032, 4
        %v1036 = vadd.f32 %v1027, %v1034
        %v1037 = vlaneseq
        %v1038 = vshrl.u32 %v1037, 7
        %v1039 = vsub.s32 0, %v1038
        %v1040 = vrot.slane %v539, %v1039
        %v1041 = vmul.f32 %v1040, %v720
        %v1042 = vadd.f32 %v1036, %v1041
        %v1043 = vlaneseq
        %v1044 = vshrl.u32 %v1043, 7
        %v1045 = vsub.s32 0, %v1044
        %v1046 = vrot.slane %v543, %v1045
        %v1047 = vadd.f32 %v1042, %v1046
        %1049 = vset.pattern.permute.xlu0 16
        %1050 = vperm.xlu0 %1049, %v912
        %v1051 = vpop.permute.xlu0 %1050
        %v1053 = vlaneseq
        %v1054 = vshrl.u32 %v1053, 7
        %v1055 = vsub.s32 0, %v1054
        %v1056 = vrot.slane %v997, %v1055
        %v1057 = vsub.f32 %v1051, %v1056
        %1059 = vset.pattern.permute.xlu0 16
        %1060 = vperm.xlu0 %1059, %v942
        %v1061 = vpop.permute.xlu0 %1060
        %v1063 = vlaneseq
        %v1064 = vshrl.u32 %v1063, 7
        %v1065 = vsub.s32 0, %v1064
        %v1066 = vrot.slane %v1022, %v1065
        %v1067 = vsub.f32 %v1061, %v1066
        %1069 = vset.pattern.permute.xlu0 16
        %1070 = vperm.xlu0 %1069, %v972
        %v1071 = vpop.permute.xlu0 %1070
        %v1073 = vlaneseq
        %v1074 = vshrl.u32 %v1073, 7
        %v1075 = vsub.s32 0, %v1074
        %v1076 = vrot.slane %v1047, %v1075
        %v1077 = vsub.f32 %v1071, %v1076
        %v1078 = vmul.f32 %v1057, %v1057
        %v1079 = vmul.f32 %v1067, %v1067
        %v1080 = vadd.f32 %v1078, %v1079
        %v1081 = vmul.f32 %v1077, %v1077
        %v1082 = vadd.f32 %v1080, %v1081
        %v1083 = vrsqrt.pop %v1082
        %v1084 = vmul.f32 %v1082, %v1083
        %vm1085 = vcmp.eq.f32.partialorder %v1082, inf
        %v1086 = vsel %vm1085, %v1082, %v1084
        %vm1087 = vcmp.eq.f32.partialorder %v1082, 0.0
        %v1088 = vand.u32 %v1082, 2147483648
        %v1089 = vsel %vm1087, %v1088, %v1086
        %v1090 = vadd.f32 %v1089, 0.0
        %1091 = vset.pattern.permute.xlu0 17
        %1092 = vperm.xlu0 %1091, %v912
        %v1093 = vpop.permute.xlu0 %1092
        %v1095 = vlaneseq
        %v1096 = vshrl.u32 %v1095, 7
        %v1097 = vsub.s32 1, %v1096
        %v1098 = vrot.slane %v997, %v1097
        %v1099 = vsub.f32 %v1093, %v1098
        %1100 = vset.pattern.permute.xlu0 17
        %1101 = vperm.xlu0 %1100, %v942
        %v1102 = vpop.permute.xlu0 %1101
        %v1104 = vlaneseq
        %v1105 = vshrl.u32 %v1104, 7
        %v1106 = vsub.s32 1, %v1105
        %v1107 = vrot.slane %v1022, %v1106
        %v1108 = vsub.f32 %v1102, %v1107
        %1109 = vset.pattern.permute.xlu0 17
        %1110 = vperm.xlu0 %1109, %v972
        %v1111 = vpop.permute.xlu0 %1110
        %v1113 = vlaneseq
        %v1114 = vshrl.u32 %v1113, 7
        %v1115 = vsub.s32 1, %v1114
        %v1116 = vrot.slane %v1047, %v1115
        %v1117 = vsub.f32 %v1111, %v1116
        %v1118 = vmul.f32 %v1099, %v1099
        %v1119 = vmul.f32 %v1108, %v1108
        %v1120 = vadd.f32 %v1118, %v1119
        %v1121 = vmul.f32 %v1117, %v1117
        %v1122 = vadd.f32 %v1120, %v1121
        %v1123 = vrsqrt.pop %v1122
        %v1124 = vmul.f32 %v1122, %v1123
        %vm1125 = vcmp.eq.f32.partialorder %v1122, inf
        %v1126 = vsel %vm1125, %v1122, %v1124
        %vm1127 = vcmp.eq.f32.partialorder %v1122, 0.0
        %v1128 = vand.u32 %v1122, 2147483648
        %v1129 = vsel %vm1127, %v1128, %v1126
        %v1130 = vadd.f32 %v1090, %v1129
        %1131 = vset.pattern.permute.xlu0 18
        %1132 = vperm.xlu0 %1131, %v912
        %v1133 = vpop.permute.xlu0 %1132
        %v1135 = vlaneseq
        %v1136 = vshrl.u32 %v1135, 7
        %v1137 = vsub.s32 2, %v1136
        %v1138 = vrot.slane %v997, %v1137
        %v1139 = vsub.f32 %v1133, %v1138
        %1140 = vset.pattern.permute.xlu0 18
        %1141 = vperm.xlu0 %1140, %v942
        %v1142 = vpop.permute.xlu0 %1141
        %v1144 = vlaneseq
        %v1145 = vshrl.u32 %v1144, 7
        %v1146 = vsub.s32 2, %v1145
        %v1147 = vrot.slane %v1022, %v1146
        %v1148 = vsub.f32 %v1142, %v1147
        %1149 = vset.pattern.permute.xlu0 18
        %1150 = vperm.xlu0 %1149, %v972
        %v1151 = vpop.permute.xlu0 %1150
        %v1153 = vlaneseq
        %v1154 = vshrl.u32 %v1153, 7
        %v1155 = vsub.s32 2, %v1154
        %v1156 = vrot.slane %v1047, %v1155
        %v1157 = vsub.f32 %v1151, %v1156
        %v1158 = vmul.f32 %v1139, %v1139
        %v1159 = vmul.f32 %v1148, %v1148
        %v1160 = vadd.f32 %v1158, %v1159
        %v1161 = vmul.f32 %v1157, %v1157
        %v1162 = vadd.f32 %v1160, %v1161
        %v1163 = vrsqrt.pop %v1162
        %v1164 = vmul.f32 %v1162, %v1163
        %vm1165 = vcmp.eq.f32.partialorder %v1162, inf
        %v1166 = vsel %vm1165, %v1162, %v1164
        %vm1167 = vcmp.eq.f32.partialorder %v1162, 0.0
        %v1168 = vand.u32 %v1162, 2147483648
        %v1169 = vsel %vm1167, %v1168, %v1166
        %v1170 = vadd.f32 %v1130, %v1169
        %1171 = vset.pattern.permute.xlu0 19
        %1172 = vperm.xlu0 %1171, %v912
        %v1173 = vpop.permute.xlu0 %1172
        %v1175 = vlaneseq
        %v1176 = vshrl.u32 %v1175, 7
        %v1177 = vsub.s32 3, %v1176
        %v1178 = vrot.slane %v997, %v1177
        %v1179 = vsub.f32 %v1173, %v1178
        %1180 = vset.pattern.permute.xlu0 19
        %1181 = vperm.xlu0 %1180, %v942
        %v1182 = vpop.permute.xlu0 %1181
        %v1184 = vlaneseq
        %v1185 = vshrl.u32 %v1184, 7
        %v1186 = vsub.s32 3, %v1185
        %v1187 = vrot.slane %v1022, %v1186
        %v1188 = vsub.f32 %v1182, %v1187
        %1189 = vset.pattern.permute.xlu0 19
        %1190 = vperm.xlu0 %1189, %v972
        %v1191 = vpop.permute.xlu0 %1190
        %v1193 = vlaneseq
        %v1194 = vshrl.u32 %v1193, 7
        %v1195 = vsub.s32 3, %v1194
        %v1196 = vrot.slane %v1047, %v1195
        %v1197 = vsub.f32 %v1191, %v1196
        %v1198 = vmul.f32 %v1179, %v1179
        %v1199 = vmul.f32 %v1188, %v1188
        %v1200 = vadd.f32 %v1198, %v1199
        %v1201 = vmul.f32 %v1197, %v1197
        %v1202 = vadd.f32 %v1200, %v1201
        %v1203 = vrsqrt.pop %v1202
        %v1204 = vmul.f32 %v1202, %v1203
        %vm1205 = vcmp.eq.f32.partialorder %v1202, inf
        %v1206 = vsel %vm1205, %v1202, %v1204
        %vm1207 = vcmp.eq.f32.partialorder %v1202, 0.0
        %v1208 = vand.u32 %v1202, 2147483648
        %v1209 = vsel %vm1207, %v1208, %v1206
        %v1210 = vadd.f32 %v1170, %v1209
        %v1227 = vlaneseq
        %v1228 = vand.u32 %v1227, 127
        %v1229 = vlaneseq
        %v1230 = vshrl.u32 %v1229, 7
        %v1231 = vsub.s32 %v1228, %v1230
        %v1232 = vrot.slane %v835, %v1231
        %v1233 = vadd.s32 %v1228, 4294967288
        %v1234 = vlaneseq
        %v1235 = vshrl.u32 %v1234, 7
        %v1236 = vsub.s32 %v1233, %v1235
        %v1237 = vrot.slane %v838, %v1236
        %vm1238 = vcmask 130112
        %v1239 = vsel %vm1238, %v1237, %v1232
        %v1240 = vlaneseq
        %v1241 = vshrl.u32 %v1240, 7
        %v1242 = vsub.s32 %v1228, %v1241
        %v1243 = vrot.slane %v841, %v1242
        %v1244 = vlaneseq
        %v1245 = vshrl.u32 %v1244, 7
        %v1246 = vsub.s32 %v1233, %v1245
        %v1247 = vrot.slane %v844, %v1246
        %v1248 = vsel %vm1238, %v1247, %v1243
        %v1249 = vlaneseq
        %v1250 = vshrl.u32 %v1249, 7
        %v1251 = vsub.s32 %v1228, %v1250
        %v1252 = vrot.slane %v847, %v1251
        %v1253 = vlaneseq
        %v1254 = vshrl.u32 %v1253, 7
        %v1255 = vsub.s32 %v1233, %v1254
        %v1256 = vrot.slane %v850, %v1255
        %v1257 = vsel %vm1238, %v1256, %v1252
        %v1258 = vlaneseq
        %v1259 = vshrl.u32 %v1258, 7
        %v1260 = vsub.s32 %v1228, %v1259
        %v1261 = vrot.slane %v853, %v1260
        %v1262 = vlaneseq
        %v1263 = vshrl.u32 %v1262, 7
        %v1264 = vsub.s32 %v1233, %v1263
        %v1265 = vrot.slane %v856, %v1264
        %v1266 = vsel %vm1238, %v1265, %v1261
        %v1267 = vlaneseq
        %v1268 = vshrl.u32 %v1267, 7
        %v1269 = vsub.s32 %v1228, %v1268
        %v1270 = vrot.slane %v859, %v1269
        %v1271 = vlaneseq
        %v1272 = vshrl.u32 %v1271, 7
        %v1273 = vsub.s32 %v1233, %v1272
        %v1274 = vrot.slane %v862, %v1273
        %v1275 = vsel %vm1238, %v1274, %v1270
        %v1276 = vlaneseq
        %v1277 = vshrl.u32 %v1276, 7
        %v1278 = vsub.s32 %v1228, %v1277
        %v1279 = vrot.slane %v865, %v1278
        %v1280 = vlaneseq
        %v1281 = vshrl.u32 %v1280, 7
        %v1282 = vsub.s32 %v1233, %v1281
        %v1283 = vrot.slane %v868, %v1282
        %v1284 = vsel %vm1238, %v1283, %v1279
        %v1285 = vlaneseq
        %v1286 = vshrl.u32 %v1285, 7
        %v1287 = vsub.s32 %v1228, %v1286
        %v1288 = vrot.slane %v871, %v1287
        %v1289 = vlaneseq
        %v1290 = vshrl.u32 %v1289, 7
        %v1291 = vsub.s32 %v1233, %v1290
        %v1292 = vrot.slane %v874, %v1291
        %v1293 = vsel %vm1238, %v1292, %v1288
        %v1294 = vlaneseq
        %v1295 = vshrl.u32 %v1294, 7
        %v1296 = vsub.s32 %v1228, %v1295
        %v1297 = vrot.slane %v877, %v1296
        %v1298 = vlaneseq
        %v1299 = vshrl.u32 %v1298, 7
        %v1300 = vsub.s32 %v1233, %v1299
        %v1301 = vrot.slane %v880, %v1300
        %v1302 = vsel %vm1238, %v1301, %v1297
        %vm1303 = vcmask 1041409
        %v1304 = vsel %vm1303, %v1248, %v1239
        %vm1305 = vcmask 1042434
        %v1306 = vsel %vm1305, %v1257, %v1304
        %vm1307 = vcmask 1043459
        %v1308 = vsel %vm1307, %v1266, %v1306
        %vm1309 = vcmask 1044484
        %v1310 = vsel %vm1309, %v1275, %v1308
        %vm1311 = vcmask 1045509
        %v1312 = vsel %vm1311, %v1284, %v1310
        %vm1313 = vcmask 1046534
        %v1314 = vsel %vm1313, %v1293, %v1312
        %vm1315 = vcmask 1047559
        %v1316 = vsel %vm1315, %v1302, %v1314
        %v1318 = vadd.f32 %v792, %v1316
        %s1319 = sld [smem:[#allocation3 + %s33]]
        %s1320 = smul.f32 %s1319, 0.11785113
        %v1321 = vstv %s1320
        %v1322 = vmul.f32 %v1321, %v1210
        %v1323 = vsub.f32 %v1318, %v1322
        %v1324 = vmul.f32 %v1323, 0.57735026
        %v1325 = vsel %vm748, %v1324, -inf
        %1326 = vmax.xlane.f32.xlu0 %v1325
        %v1327 = vpop.xlane.xlu0 %1326
        %v1328 = vsub.f32 %v1324, %v1327
        %v1329 = vmul.f32 %v1328, 1.442695
        %v1330 = vpow.pop %v1329
        %v1331 = vsel %vm748, %v1330, 0.0
        %1332 = vadd.xlane.f32.xlu0 %v1331
        %v1333 = vpop.xlane.xlu0 %1332
        %v1334 = vrcp.pop %v1333
        %v1335 = vpack.c.bf16 %v1330, %v1330
        %v1336 = vmul.f32 %v976, %v728
        %v1337 = vmul.f32 %v976, %v733
        %v1338 = vmul.f32 %v981, %v733
        %v1339 = vmul.f32 %v981, %v736
        %v1340 = vadd.f32 %v1336, %v1338
        %v1341 = vadd.f32 %v1337, %v1339
        %v1342 = vmul.f32 %v990, %v736
        %v1343 = vmul.f32 %v990, %v741
        %v1344 = vadd.f32 %v1340, %v1342
        %v1345 = vadd.f32 %v1341, %v1343
        %v1346 = vadd.f32 %v1344, %v996
        %v1347 = vadd.f32 %v1345, %v996
        %v1348 = vmul.f32 %v1001, %v728
        %v1349 = vmul.f32 %v1001, %v733
        %v1350 = vmul.f32 %v1006, %v733
        %v1351 = vmul.f32 %v1006, %v736
        %v1352 = vadd.f32 %v1348, %v1350
        %v1353 = vadd.f32 %v1349, %v1351
        %v1354 = vmul.f32 %v1015, %v736
        %v1355 = vmul.f32 %v1015, %v741
        %v1356 = vadd.f32 %v1352, %v1354
        %v1357 = vadd.f32 %v1353, %v1355
        %v1358 = vadd.f32 %v1356, %v1021
        %v1359 = vadd.f32 %v1357, %v1021
        %v1360 = vmul.f32 %v1026, %v728
        %v1361 = vmul.f32 %v1026, %v733
        %v1362 = vmul.f32 %v1031, %v733
        %v1363 = vmul.f32 %v1031, %v736
        %v1364 = vadd.f32 %v1360, %v1362
        %v1365 = vadd.f32 %v1361, %v1363
        %v1366 = vmul.f32 %v1040, %v736
        %v1367 = vmul.f32 %v1040, %v741
        %v1368 = vadd.f32 %v1364, %v1366
        %v1369 = vadd.f32 %v1365, %v1367
        %v1370 = vadd.f32 %v1368, %v1046
        %v1371 = vadd.f32 %v1369, %v1046
        %vm1375 = vcmask 1043456
        %v1376 = vrot.slane %v720, 4
        %v1377 = vrot.slane %v725, 4
        %v1378 = vsel %vm1375, %v1376, %v1377
        %v1379 = vrot.slane %v728, 4
        %v1380 = vsel %vm1375, %v1377, %v1379
        %v1385 = vrot.slane %v1346, 4
        %v1386 = vrot.slane %v1347, 4
        %v1387 = vsel %vm1375, %v1385, %v1386
        %v1391 = vrot.slane %v1358, 4
        %v1392 = vrot.slane %v1359, 4
        %v1393 = vsel %vm1375, %v1391, %v1392
        %v1397 = vrot.slane %v1370, 4
        %v1398 = vrot.slane %v1371, 4
        %v1399 = vsel %vm1375, %v1397, %v1398
        %v1401 = vpack.c.bf16 %v1380, %v1378
        %v1402 = vpack.c.bf16 %v1393, %v1387
        %v1403 = vpack.c.bf16 %v1399, %v1399
        %v1405 = vsel %vm748, %v1335, 0
        %v1408 = vsel %vm748, %v1401, 0
        %v1411 = vsel %vm748, %v1402, 0
        %v1414 = vsel %vm748, %v1403, 0
        %1416 = vmatprep.subr.bf16.mxu0 0
        %1417 = vmatpush1.bf16.xpose.msra.mxu0 %v1408
        %1418 = vmatprep.subr.bf16.mxu0 0
        %1419 = vmatpush1.bf16.xpose.msra.mxu0 %v1411
        %1420 = vmatprep.subr.bf16.mxu0 0
        %1421 = vmatpush1.bf16.xpose.msra.mxu0 %v1414
        %1422 = vmatprep.subr.bf16.mxu0 0
        %1423 = vmatpush1.bf16.xpose.msra.mxu0 0
        %1424 = vmatprep.subr.bf16.mxu0 0
        %1425 = vmatpush1.bf16.xpose.msra.mxu0 0
        %1426 = vmatprep.subr.bf16.mxu0 0
        %1427 = vmatpush1.bf16.xpose.msra.mxu0 0
        %1428 = vmatprep.subr.bf16.mxu0 0
        %1429 = vmatpush1.bf16.xpose.msra.mxu0 0
        %1430 = vmatprep.subr.bf16.mxu0 0
        %1431 = vmatpush1.bf16.xpose.msra.mxu0 0
        %1432 = vmatprep.subr.bf16.mxu0 0
        %1433 = vmatpush1.bf16.xpose.msra.mxu0 0
        %1434 = vmatprep.subr.bf16.mxu0 0
        %1435 = vmatpush1.bf16.xpose.msra.mxu0 0
        %1436 = vmatprep.subr.bf16.mxu0 0
        %1437 = vmatpush1.bf16.xpose.msra.mxu0 0
        %1438 = vmatprep.subr.bf16.mxu0 0
        %1439 = vmatpush1.bf16.xpose.msra.mxu0 0
        %1440 = vmatprep.subr.bf16.mxu0 0
        %1441 = vmatpush1.bf16.xpose.msra.mxu0 0
        %1442 = vmatprep.subr.bf16.mxu0 0
        %1443 = vmatpush1.bf16.xpose.msra.mxu0 0
        %1444 = vmatprep.subr.bf16.mxu0 0
        %1445 = vmatpush1.bf16.xpose.msra.mxu0 0
        %1446 = vmatprep.subr.bf16.mxu0 0
        %1447 = vmatpush1.bf16.xpose.msra.mxu0 0
        %1448 = vmatprep.mubr.bf16.mxu0 0
        %1449 = vmatmul.mubr.bf16.gmra.mrb[0].mxu0 %v1405
        %v1450 = vpop.f32.mrb[0].mxu0
        %v1451 = vadd.f32 0.0, %v1450
        %v1452 = vpop.f32.mrb[0].mxu0
        %v1453 = vpop.f32.mrb[0].mxu0
        %v1454 = vpop.f32.mrb[0].mxu0
        %1455 = vdwg.mxu0
        %v1456 = vmul.f32 %v1451, %v1334
        %v1459 = vunpack.c.l.s4 1966171168
        %v1460 = vunpack.c.0.s8 %v1459
        %v1461 = vlaneseq
        %v1462 = vshrl.u32 %v1461, 7
        %v1463 = vsub.s32 %v1460, %v1462
        %v1464 = vrot.slane %v1335, %v1463
        %v1465 = vcombine.high %v1464, %v1464
        %v1467 = vunpack.c.l.s4 1966171168
        %v1468 = vunpack.c.0.s8 %v1467
        %v1469 = vlaneseq
        %v1470 = vshrl.u32 %v1469, 7
        %v1471 = vsub.s32 %v1468, %v1470
        %v1472 = vrot.slane %v1464, %v1471
        %v1474 = vunpack.c.l.s4 1966171168
        %v1475 = vunpack.c.0.s8 %v1474
        %v1476 = vlaneseq
        %v1477 = vshrl.u32 %v1476, 7
        %v1478 = vsub.s32 %v1475, %v1477
        %v1479 = vrot.slane %v1465, %v1478
        %v1480 = vcombine.high %v1472, %v1472
        %v1481 = vcombine.high %v1479, %v1479
        %v1482 = vunpack.i.l.s16 %v1472
        %v1483 = vunpack.i.h.s16 %v1472
        %v1484 = vunpack.i.l.s16 %v1479
        %v1485 = vunpack.i.h.s16 %v1479
        %v1486 = vunpack.i.l.s16 %v1480
        %v1487 = vunpack.i.h.s16 %v1480
        %v1488 = vunpack.i.l.s16 %v1481
        %v1489 = vunpack.i.h.s16 %v1481
        %v1490 = vpack.c.bf16 %v794, %v793
        %v1491 = vpack.c.bf16 %v796, %v795
        %v1492 = vpack.c.bf16 %v798, %v797
        %v1493 = vpack.c.bf16 %v800, %v799
        %v1494 = vpack.c.bf16 %v802, %v801
        %v1495 = vpack.c.bf16 %v804, %v803
        %v1496 = vpack.c.bf16 %v806, %v805
        %v1497 = vpack.c.bf16 %v808, %v807
        %v1498 = vpack.i.b16 %v1482, %v1482
        %v1499 = vlaneseq
        %v1500 = vshrl.u32 %v1499, 7
        %v1501 = vsub.s32 0, %v1500
        %v1502 = vrot.slane %v1498, %v1501
        %v1504 = vsel %vm748, %v1502, 0
        %1506 = vmatprep.subr.bf16.mxu0 0
        %1507 = vmatpush1.bf16.msra.mxu0 %v1490
        %1508 = vmatprep.subr.bf16.mxu0 0
        %1509 = vmatpush1.bf16.msra.mxu0 0
        %1510 = vmatprep.subr.bf16.mxu0 0
        %1511 = vmatpush1.bf16.msra.mxu0 0
        %1512 = vmatprep.subr.bf16.mxu0 0
        %1513 = vmatpush1.bf16.msra.mxu0 0
        %1514 = vmatprep.subr.bf16.mxu0 0
        %1515 = vmatpush1.bf16.msra.mxu0 0
        %1516 = vmatprep.subr.bf16.mxu0 0
        %1517 = vmatpush1.bf16.msra.mxu0 0
        %1518 = vmatprep.subr.bf16.mxu0 0
        %1519 = vmatpush1.bf16.msra.mxu0 0
        %1520 = vmatprep.subr.bf16.mxu0 0
        %1521 = vmatpush1.bf16.msra.mxu0 0
        %1522 = vmatprep.subr.bf16.mxu0 0
        %1523 = vmatpush1.bf16.msra.mxu0 0
        %1524 = vmatprep.subr.bf16.mxu0 0
        %1525 = vmatpush1.bf16.msra.mxu0 0
        %1526 = vmatprep.subr.bf16.mxu0 0
        %1527 = vmatpush1.bf16.msra.mxu0 0
        %1528 = vmatprep.subr.bf16.mxu0 0
        %1529 = vmatpush1.bf16.msra.mxu0 0
        %1530 = vmatprep.subr.bf16.mxu0 0
        %1531 = vmatpush1.bf16.msra.mxu0 0
        %1532 = vmatprep.subr.bf16.mxu0 0
        %1533 = vmatpush1.bf16.msra.mxu0 0
        %1534 = vmatprep.subr.bf16.mxu0 0
        %1535 = vmatpush1.bf16.msra.mxu0 0
        %1536 = vmatprep.subr.bf16.mxu0 0
        %1537 = vmatpush1.bf16.msra.mxu0 0
        %1538 = vmatprep.mubr.bf16.mxu0 0
        %1539 = vmatmul.mubr.bf16.gmra.mrb[0].mxu0 %v1504
        %v1540 = vpop.f32.mrb[0].mxu0
        %v1541 = vadd.f32 0.0, %v1540
        %v1542 = vpop.f32.mrb[0].mxu0
        %v1543 = vpop.f32.mrb[0].mxu0
        %v1544 = vpop.f32.mrb[0].mxu0
        %1545 = vdwg.mxu0
        %v1546 = vpack.i.b16 %v1483, %v1483
        %v1547 = vlaneseq
        %v1548 = vshrl.u32 %v1547, 7
        %v1549 = vsub.s32 0, %v1548
        %v1550 = vrot.slane %v1546, %v1549
        %v1552 = vsel %vm748, %v1550, 0
        %1554 = vmatprep.subr.bf16.mxu0 0
        %1555 = vmatpush1.bf16.msra.mxu0 %v1491
        %1556 = vmatprep.subr.bf16.mxu0 0
        %1557 = vmatpush1.bf16.msra.mxu0 0
        %1558 = vmatprep.subr.bf16.mxu0 0
        %1559 = vmatpush1.bf16.msra.mxu0 0
        %1560 = vmatprep.subr.bf16.mxu0 0
        %1561 = vmatpush1.bf16.msra.mxu0 0
        %1562 = vmatprep.subr.bf16.mxu0 0
        %1563 = vmatpush1.bf16.msra.mxu0 0
        %1564 = vmatprep.subr.bf16.mxu0 0
        %1565 = vmatpush1.bf16.msra.mxu0 0
        %1566 = vmatprep.subr.bf16.mxu0 0
        %1567 = vmatpush1.bf16.msra.mxu0 0
        %1568 = vmatprep.subr.bf16.mxu0 0
        %1569 = vmatpush1.bf16.msra.mxu0 0
        %1570 = vmatprep.subr.bf16.mxu0 0
        %1571 = vmatpush1.bf16.msra.mxu0 0
        %1572 = vmatprep.subr.bf16.mxu0 0
        %1573 = vmatpush1.bf16.msra.mxu0 0
        %1574 = vmatprep.subr.bf16.mxu0 0
        %1575 = vmatpush1.bf16.msra.mxu0 0
        %1576 = vmatprep.subr.bf16.mxu0 0
        %1577 = vmatpush1.bf16.msra.mxu0 0
        %1578 = vmatprep.subr.bf16.mxu0 0
        %1579 = vmatpush1.bf16.msra.mxu0 0
        %1580 = vmatprep.subr.bf16.mxu0 0
        %1581 = vmatpush1.bf16.msra.mxu0 0
        %1582 = vmatprep.subr.bf16.mxu0 0
        %1583 = vmatpush1.bf16.msra.mxu0 0
        %1584 = vmatprep.subr.bf16.mxu0 0
        %1585 = vmatpush1.bf16.msra.mxu0 0
        %1586 = vmatprep.mubr.bf16.mxu0 0
        %1587 = vmatmul.mubr.bf16.gmra.mrb[0].mxu0 %v1552
        %v1588 = vpop.f32.mrb[0].mxu0
        %v1589 = vadd.f32 0.0, %v1588
        %v1590 = vpop.f32.mrb[0].mxu0
        %v1591 = vpop.f32.mrb[0].mxu0
        %v1592 = vpop.f32.mrb[0].mxu0
        %1593 = vdwg.mxu0
        %v1594 = vpack.i.b16 %v1484, %v1484
        %v1595 = vlaneseq
        %v1596 = vshrl.u32 %v1595, 7
        %v1597 = vsub.s32 0, %v1596
        %v1598 = vrot.slane %v1594, %v1597
        %v1600 = vsel %vm748, %v1598, 0
        %1602 = vmatprep.subr.bf16.mxu0 0
        %1603 = vmatpush1.bf16.msra.mxu0 %v1492
        %1604 = vmatprep.subr.bf16.mxu0 0
        %1605 = vmatpush1.bf16.msra.mxu0 0
        %1606 = vmatprep.subr.bf16.mxu0 0
        %1607 = vmatpush1.bf16.msra.mxu0 0
        %1608 = vmatprep.subr.bf16.mxu0 0
        %1609 = vmatpush1.bf16.msra.mxu0 0
        %1610 = vmatprep.subr.bf16.mxu0 0
        %1611 = vmatpush1.bf16.msra.mxu0 0
        %1612 = vmatprep.subr.bf16.mxu0 0
        %1613 = vmatpush1.bf16.msra.mxu0 0
        %1614 = vmatprep.subr.bf16.mxu0 0
        %1615 = vmatpush1.bf16.msra.mxu0 0
        %1616 = vmatprep.subr.bf16.mxu0 0
        %1617 = vmatpush1.bf16.msra.mxu0 0
        %1618 = vmatprep.subr.bf16.mxu0 0
        %1619 = vmatpush1.bf16.msra.mxu0 0
        %1620 = vmatprep.subr.bf16.mxu0 0
        %1621 = vmatpush1.bf16.msra.mxu0 0
        %1622 = vmatprep.subr.bf16.mxu0 0
        %1623 = vmatpush1.bf16.msra.mxu0 0
        %1624 = vmatprep.subr.bf16.mxu0 0
        %1625 = vmatpush1.bf16.msra.mxu0 0
        %1626 = vmatprep.subr.bf16.mxu0 0
        %1627 = vmatpush1.bf16.msra.mxu0 0
        %1628 = vmatprep.subr.bf16.mxu0 0
        %1629 = vmatpush1.bf16.msra.mxu0 0
        %1630 = vmatprep.subr.bf16.mxu0 0
        %1631 = vmatpush1.bf16.msra.mxu0 0
        %1632 = vmatprep.subr.bf16.mxu0 0
        %1633 = vmatpush1.bf16.msra.mxu0 0
        %1634 = vmatprep.mubr.bf16.mxu0 0
        %1635 = vmatmul.mubr.bf16.gmra.mrb[0].mxu0 %v1600
        %v1636 = vpop.f32.mrb[0].mxu0
        %v1637 = vadd.f32 0.0, %v1636
        %v1638 = vpop.f32.mrb[0].mxu0
        %v1639 = vpop.f32.mrb[0].mxu0
        %v1640 = vpop.f32.mrb[0].mxu0
        %1641 = vdwg.mxu0
        %v1642 = vpack.i.b16 %v1485, %v1485
        %v1643 = vlaneseq
        %v1644 = vshrl.u32 %v1643, 7
        %v1645 = vsub.s32 0, %v1644
        %v1646 = vrot.slane %v1642, %v1645
        %v1648 = vsel %vm748, %v1646, 0
        %1650 = vmatprep.subr.bf16.mxu0 0
        %1651 = vmatpush1.bf16.msra.mxu0 %v1493
        %1652 = vmatprep.subr.bf16.mxu0 0
        %1653 = vmatpush1.bf16.msra.mxu0 0
        %1654 = vmatprep.subr.bf16.mxu0 0
        %1655 = vmatpush1.bf16.msra.mxu0 0
        %1656 = vmatprep.subr.bf16.mxu0 0
        %1657 = vmatpush1.bf16.msra.mxu0 0
        %1658 = vmatprep.subr.bf16.mxu0 0
        %1659 = vmatpush1.bf16.msra.mxu0 0
        %1660 = vmatprep.subr.bf16.mxu0 0
        %1661 = vmatpush1.bf16.msra.mxu0 0
        %1662 = vmatprep.subr.bf16.mxu0 0
        %1663 = vmatpush1.bf16.msra.mxu0 0
        %1664 = vmatprep.subr.bf16.mxu0 0
        %1665 = vmatpush1.bf16.msra.mxu0 0
        %1666 = vmatprep.subr.bf16.mxu0 0
        %1667 = vmatpush1.bf16.msra.mxu0 0
        %1668 = vmatprep.subr.bf16.mxu0 0
        %1669 = vmatpush1.bf16.msra.mxu0 0
        %1670 = vmatprep.subr.bf16.mxu0 0
        %1671 = vmatpush1.bf16.msra.mxu0 0
        %1672 = vmatprep.subr.bf16.mxu0 0
        %1673 = vmatpush1.bf16.msra.mxu0 0
        %1674 = vmatprep.subr.bf16.mxu0 0
        %1675 = vmatpush1.bf16.msra.mxu0 0
        %1676 = vmatprep.subr.bf16.mxu0 0
        %1677 = vmatpush1.bf16.msra.mxu0 0
        %1678 = vmatprep.subr.bf16.mxu0 0
        %1679 = vmatpush1.bf16.msra.mxu0 0
        %1680 = vmatprep.subr.bf16.mxu0 0
        %1681 = vmatpush1.bf16.msra.mxu0 0
        %1682 = vmatprep.mubr.bf16.mxu0 0
        %1683 = vmatmul.mubr.bf16.gmra.mrb[0].mxu0 %v1648
        %v1684 = vpop.f32.mrb[0].mxu0
        %v1685 = vadd.f32 0.0, %v1684
        %v1686 = vpop.f32.mrb[0].mxu0
        %v1687 = vpop.f32.mrb[0].mxu0
        %v1688 = vpop.f32.mrb[0].mxu0
        %1689 = vdwg.mxu0
        %v1690 = vpack.i.b16 %v1486, %v1486
        %v1691 = vlaneseq
        %v1692 = vshrl.u32 %v1691, 7
        %v1693 = vsub.s32 0, %v1692
        %v1694 = vrot.slane %v1690, %v1693
        %v1696 = vsel %vm748, %v1694, 0
        %1698 = vmatprep.subr.bf16.mxu0 0
        %1699 = vmatpush1.bf16.msra.mxu0 %v1494
        %1700 = vmatprep.subr.bf16.mxu0 0
        %1701 = vmatpush1.bf16.msra.mxu0 0
        %1702 = vmatprep.subr.bf16.mxu0 0
        %1703 = vmatpush1.bf16.msra.mxu0 0
        %1704 = vmatprep.subr.bf16.mxu0 0
        %1705 = vmatpush1.bf16.msra.mxu0 0
        %1706 = vmatprep.subr.bf16.mxu0 0
        %1707 = vmatpush1.bf16.msra.mxu0 0
        %1708 = vmatprep.subr.bf16.mxu0 0
        %1709 = vmatpush1.bf16.msra.mxu0 0
        %1710 = vmatprep.subr.bf16.mxu0 0
        %1711 = vmatpush1.bf16.msra.mxu0 0
        %1712 = vmatprep.subr.bf16.mxu0 0
        %1713 = vmatpush1.bf16.msra.mxu0 0
        %1714 = vmatprep.subr.bf16.mxu0 0
        %1715 = vmatpush1.bf16.msra.mxu0 0
        %1716 = vmatprep.subr.bf16.mxu0 0
        %1717 = vmatpush1.bf16.msra.mxu0 0
        %1718 = vmatprep.subr.bf16.mxu0 0
        %1719 = vmatpush1.bf16.msra.mxu0 0
        %1720 = vmatprep.subr.bf16.mxu0 0
        %1721 = vmatpush1.bf16.msra.mxu0 0
        %1722 = vmatprep.subr.bf16.mxu0 0
        %1723 = vmatpush1.bf16.msra.mxu0 0
        %1724 = vmatprep.subr.bf16.mxu0 0
        %1725 = vmatpush1.bf16.msra.mxu0 0
        %1726 = vmatprep.subr.bf16.mxu0 0
        %1727 = vmatpush1.bf16.msra.mxu0 0
        %1728 = vmatprep.subr.bf16.mxu0 0
        %1729 = vmatpush1.bf16.msra.mxu0 0
        %1730 = vmatprep.mubr.bf16.mxu0 0
        %1731 = vmatmul.mubr.bf16.gmra.mrb[0].mxu0 %v1696
        %v1732 = vpop.f32.mrb[0].mxu0
        %v1733 = vadd.f32 0.0, %v1732
        %v1734 = vpop.f32.mrb[0].mxu0
        %v1735 = vpop.f32.mrb[0].mxu0
        %v1736 = vpop.f32.mrb[0].mxu0
        %1737 = vdwg.mxu0
        %v1738 = vpack.i.b16 %v1487, %v1487
        %v1739 = vlaneseq
        %v1740 = vshrl.u32 %v1739, 7
        %v1741 = vsub.s32 0, %v1740
        %v1742 = vrot.slane %v1738, %v1741
        %v1744 = vsel %vm748, %v1742, 0
        %1746 = vmatprep.subr.bf16.mxu0 0
        %1747 = vmatpush1.bf16.msra.mxu0 %v1495
        %1748 = vmatprep.subr.bf16.mxu0 0
        %1749 = vmatpush1.bf16.msra.mxu0 0
        %1750 = vmatprep.subr.bf16.mxu0 0
        %1751 = vmatpush1.bf16.msra.mxu0 0
        %1752 = vmatprep.subr.bf16.mxu0 0
        %1753 = vmatpush1.bf16.msra.mxu0 0
        %1754 = vmatprep.subr.bf16.mxu0 0
        %1755 = vmatpush1.bf16.msra.mxu0 0
        %1756 = vmatprep.subr.bf16.mxu0 0
        %1757 = vmatpush1.bf16.msra.mxu0 0
        %1758 = vmatprep.subr.bf16.mxu0 0
        %1759 = vmatpush1.bf16.msra.mxu0 0
        %1760 = vmatprep.subr.bf16.mxu0 0
        %1761 = vmatpush1.bf16.msra.mxu0 0
        %1762 = vmatprep.subr.bf16.mxu0 0
        %1763 = vmatpush1.bf16.msra.mxu0 0
        %1764 = vmatprep.subr.bf16.mxu0 0
        %1765 = vmatpush1.bf16.msra.mxu0 0
        %1766 = vmatprep.subr.bf16.mxu0 0
        %1767 = vmatpush1.bf16.msra.mxu0 0
        %1768 = vmatprep.subr.bf16.mxu0 0
        %1769 = vmatpush1.bf16.msra.mxu0 0
        %1770 = vmatprep.subr.bf16.mxu0 0
        %1771 = vmatpush1.bf16.msra.mxu0 0
        %1772 = vmatprep.subr.bf16.mxu0 0
        %1773 = vmatpush1.bf16.msra.mxu0 0
        %1774 = vmatprep.subr.bf16.mxu0 0
        %1775 = vmatpush1.bf16.msra.mxu0 0
        %1776 = vmatprep.subr.bf16.mxu0 0
        %1777 = vmatpush1.bf16.msra.mxu0 0
        %1778 = vmatprep.mubr.bf16.mxu0 0
        %1779 = vmatmul.mubr.bf16.gmra.mrb[0].mxu0 %v1744
        %v1780 = vpop.f32.mrb[0].mxu0
        %v1781 = vadd.f32 0.0, %v1780
        %v1782 = vpop.f32.mrb[0].mxu0
        %v1783 = vpop.f32.mrb[0].mxu0
        %v1784 = vpop.f32.mrb[0].mxu0
        %1785 = vdwg.mxu0
        %v1786 = vpack.i.b16 %v1488, %v1488
        %v1787 = vlaneseq
        %v1788 = vshrl.u32 %v1787, 7
        %v1789 = vsub.s32 0, %v1788
        %v1790 = vrot.slane %v1786, %v1789
        %v1792 = vsel %vm748, %v1790, 0
        %1794 = vmatprep.subr.bf16.mxu0 0
        %1795 = vmatpush1.bf16.msra.mxu0 %v1496
        %1796 = vmatprep.subr.bf16.mxu0 0
        %1797 = vmatpush1.bf16.msra.mxu0 0
        %1798 = vmatprep.subr.bf16.mxu0 0
        %1799 = vmatpush1.bf16.msra.mxu0 0
        %1800 = vmatprep.subr.bf16.mxu0 0
        %1801 = vmatpush1.bf16.msra.mxu0 0
        %1802 = vmatprep.subr.bf16.mxu0 0
        %1803 = vmatpush1.bf16.msra.mxu0 0
        %1804 = vmatprep.subr.bf16.mxu0 0
        %1805 = vmatpush1.bf16.msra.mxu0 0
        %1806 = vmatprep.subr.bf16.mxu0 0
        %1807 = vmatpush1.bf16.msra.mxu0 0
        %1808 = vmatprep.subr.bf16.mxu0 0
        %1809 = vmatpush1.bf16.msra.mxu0 0
        %1810 = vmatprep.subr.bf16.mxu0 0
        %1811 = vmatpush1.bf16.msra.mxu0 0
        %1812 = vmatprep.subr.bf16.mxu0 0
        %1813 = vmatpush1.bf16.msra.mxu0 0
        %1814 = vmatprep.subr.bf16.mxu0 0
        %1815 = vmatpush1.bf16.msra.mxu0 0
        %1816 = vmatprep.subr.bf16.mxu0 0
        %1817 = vmatpush1.bf16.msra.mxu0 0
        %1818 = vmatprep.subr.bf16.mxu0 0
        %1819 = vmatpush1.bf16.msra.mxu0 0
        %1820 = vmatprep.subr.bf16.mxu0 0
        %1821 = vmatpush1.bf16.msra.mxu0 0
        %1822 = vmatprep.subr.bf16.mxu0 0
        %1823 = vmatpush1.bf16.msra.mxu0 0
        %1824 = vmatprep.subr.bf16.mxu0 0
        %1825 = vmatpush1.bf16.msra.mxu0 0
        %1826 = vmatprep.mubr.bf16.mxu0 0
        %1827 = vmatmul.mubr.bf16.gmra.mrb[0].mxu0 %v1792
        %v1828 = vpop.f32.mrb[0].mxu0
        %v1829 = vadd.f32 0.0, %v1828
        %v1830 = vpop.f32.mrb[0].mxu0
        %v1831 = vpop.f32.mrb[0].mxu0
        %v1832 = vpop.f32.mrb[0].mxu0
        %1833 = vdwg.mxu0
        %v1834 = vpack.i.b16 %v1489, %v1489
        %v1835 = vlaneseq
        %v1836 = vshrl.u32 %v1835, 7
        %v1837 = vsub.s32 0, %v1836
        %v1838 = vrot.slane %v1834, %v1837
        %v1840 = vsel %vm748, %v1838, 0
        %1842 = vmatprep.subr.bf16.mxu0 0
        %1843 = vmatpush1.bf16.msra.mxu0 %v1497
        %1844 = vmatprep.subr.bf16.mxu0 0
        %1845 = vmatpush1.bf16.msra.mxu0 0
        %1846 = vmatprep.subr.bf16.mxu0 0
        %1847 = vmatpush1.bf16.msra.mxu0 0
        %1848 = vmatprep.subr.bf16.mxu0 0
        %1849 = vmatpush1.bf16.msra.mxu0 0
        %1850 = vmatprep.subr.bf16.mxu0 0
        %1851 = vmatpush1.bf16.msra.mxu0 0
        %1852 = vmatprep.subr.bf16.mxu0 0
        %1853 = vmatpush1.bf16.msra.mxu0 0
        %1854 = vmatprep.subr.bf16.mxu0 0
        %1855 = vmatpush1.bf16.msra.mxu0 0
        %1856 = vmatprep.subr.bf16.mxu0 0
        %1857 = vmatpush1.bf16.msra.mxu0 0
        %1858 = vmatprep.subr.bf16.mxu0 0
        %1859 = vmatpush1.bf16.msra.mxu0 0
        %1860 = vmatprep.subr.bf16.mxu0 0
        %1861 = vmatpush1.bf16.msra.mxu0 0
        %1862 = vmatprep.subr.bf16.mxu0 0
        %1863 = vmatpush1.bf16.msra.mxu0 0
        %1864 = vmatprep.subr.bf16.mxu0 0
        %1865 = vmatpush1.bf16.msra.mxu0 0
        %1866 = vmatprep.subr.bf16.mxu0 0
        %1867 = vmatpush1.bf16.msra.mxu0 0
        %1868 = vmatprep.subr.bf16.mxu0 0
        %1869 = vmatpush1.bf16.msra.mxu0 0
        %1870 = vmatprep.subr.bf16.mxu0 0
        %1871 = vmatpush1.bf16.msra.mxu0 0
        %1872 = vmatprep.subr.bf16.mxu0 0
        %1873 = vmatpush1.bf16.msra.mxu0 0
        %1874 = vmatprep.mubr.bf16.mxu0 0
        %1875 = vmatmul.mubr.bf16.gmra.mrb[0].mxu0 %v1840
        %v1876 = vpop.f32.mrb[0].mxu0
        %v1877 = vadd.f32 0.0, %v1876
        %v1878 = vpop.f32.mrb[0].mxu0
        %v1879 = vpop.f32.mrb[0].mxu0
        %v1880 = vpop.f32.mrb[0].mxu0
        %1881 = vdwg.mxu0
        %v1883 = vrot.slane %v1334, 1
        %v1884 = vrot.slane %v1334, 2
        %v1885 = vrot.slane %v1334, 3
        %v1886 = vrot.slane %v1334, 4
        %v1887 = vrot.slane %v1334, 5
        %v1888 = vrot.slane %v1334, 6
        %v1889 = vrot.slane %v1334, 7
        %v1898 = vmul.f32 %v1541, %v1334
        %v1899 = vmul.f32 %v1589, %v1883
        %v1900 = vmul.f32 %v1637, %v1884
        %v1901 = vmul.f32 %v1685, %v1885
        %v1902 = vmul.f32 %v1733, %v1886
        %v1903 = vmul.f32 %v1781, %v1887
        %v1904 = vmul.f32 %v1829, %v1888
        %v1905 = vmul.f32 %v1877, %v1889
        %v1906 = vsub.f32 %v1456, %v910
        %v1907 = vsub.f32 %v1456, %v940
        %v1908 = vsub.f32 %v1456, %v970
        %v1909 = vmul.f32 %v884, %v1906
        %v1910 = vmul.f32 %v915, %v1907
        %1912 = vrot.lane.b32.xlu0 %v1910, 120
        %v1913 = vpop.permute.xlu0 %1912
        %v1915 = vadd.f32 %v1909, %v1913
        %v1916 = vmul.f32 %v945, %v1908
        %1918 = vrot.lane.b32.xlu0 %v1916, 112
        %v1919 = vpop.permute.xlu0 %1918
        %v1921 = vadd.f32 %v1915, %v1919
        %v1922 = vmul.f32 %v889, %v1906
        %v1923 = vmul.f32 %v920, %v1907
        %1925 = vrot.lane.b32.xlu0 %v1923, 120
        %v1926 = vpop.permute.xlu0 %1925
        %v1928 = vadd.f32 %v1922, %v1926
        %v1929 = vmul.f32 %v950, %v1908
        %1931 = vrot.lane.b32.xlu0 %v1929, 112
        %v1932 = vpop.permute.xlu0 %1931
        %v1934 = vadd.f32 %v1928, %v1932
        %v1935 = vmul.f32 %v899, %v1906
        %v1936 = vmul.f32 %v930, %v1907
        %1938 = vrot.lane.b32.xlu0 %v1936, 120
        %v1939 = vpop.permute.xlu0 %1938
        %v1941 = vadd.f32 %v1935, %v1939
        %v1942 = vmul.f32 %v960, %v1908
        %1944 = vrot.lane.b32.xlu0 %v1942, 112
        %v1945 = vpop.permute.xlu0 %1944
        %v1947 = vadd.f32 %v1941, %v1945
        %v1948 = vmul.f32 %v1921, %v1921
        %v1949 = vmul.f32 %v1934, %v1934
        %v1950 = vadd.f32 %v1948, %v1949
        %v1951 = vmul.f32 %v1947, %v1947
        %v1952 = vadd.f32 %v1950, %v1951
        %v1953 = vrsqrt.pop %v1952
        %v1954 = vmul.f32 %v1952, %v1953
        %vm1955 = vcmp.eq.f32.partialorder %v1952, inf
        %v1956 = vsel %vm1955, %v1952, %v1954
        %vm1957 = vcmp.eq.f32.partialorder %v1952, 0.0
        %v1958 = vand.u32 %v1952, 2147483648
        %v1959 = vsel %vm1957, %v1958, %v1956
        %v1968 = vrot.slane %v1899, 7
        %v1969 = vsel %vm1303, %v1968, %v1898
        %v1970 = vrot.slane %v1900, 6
        %v1971 = vsel %vm1305, %v1970, %v1969
        %v1972 = vrot.slane %v1901, 5
        %v1973 = vsel %vm1307, %v1972, %v1971
        %v1974 = vrot.slane %v1902, 4
        %v1975 = vsel %vm1309, %v1974, %v1973
        %v1976 = vrot.slane %v1903, 3
        %v1977 = vsel %vm1311, %v1976, %v1975
        %v1978 = vrot.slane %v1904, 2
        %v1979 = vsel %vm1313, %v1978, %v1977
        %v1980 = vrot.slane %v1905, 1
        %v1981 = vsel %vm1315, %v1980, %v1979
        %1982 = vrot.lane.b32.xlu0 %v1981, 16
        %v1983 = vpop.permute.xlu0 %1982
        %1986 = vrot.lane.b32.xlu0 %v1959, 16
        %v1987 = vpop.permute.xlu0 %1986
        %1990 = vrot.lane.b32.xlu0 %v1921, 24
        %v1991 = vpop.permute.xlu0 %1990
        %1994 = vrot.lane.b32.xlu0 %v1934, 32
        %v1995 = vpop.permute.xlu0 %1994
        %1998 = vrot.lane.b32.xlu0 %v1947, 40
        %v1999 = vpop.permute.xlu0 %1998
        %v2001 = vsel %vm748, %v1456, %v1983
        %v2002 = vsel %vm564, %v2001, %v1987
        %vm2003 = vcmask 326656
        %v2004 = vsel %vm2003, %v2002, %v1991
        %vm2005 = vcmask 392192
        %v2006 = vsel %vm2005, %v2004, %v1995
        %vm2007 = vcmask 457728
        %v2008 = vsel %vm2007, %v2006, %v1999
        %v2009 = vld [vmem:[#allocation2] sm:$0xff]
        %v2010 = vpack.c.bf16 %v2008, %v2008
        %s2011 = smul.u32 %s33, 8
        %s2012 = smul.addr %s2011, 4
        %s2013 = scalar_lea.vmem %s6, %s2012
        %v2014 = vld [vmem:[%s2013] sm:$0xf]
        %v2015 = vld [vmem:[%s2013 + $0x4] sm:$0xf]
        %v2016 = vld [vmem:[%s2013 + $0x8] sm:$0xf]
        %v2017 = vld [vmem:[%s2013 + $0xc] sm:$0xf]
        %v2018 = vld [vmem:[%s2013 + $0x10] sm:$0xf]
        %v2019 = vld [vmem:[%s2013 + $0x14] sm:$0xf]
        %v2020 = vld [vmem:[%s2013 + $0x18] sm:$0xf]
        %v2021 = vld [vmem:[%s2013 + $0x1c] sm:$0xf]
        %v2030 = vunpack.c.l.b16 %v2014
        %v2031 = vunpack.c.l.b16 %v2015
        %v2032 = vunpack.c.l.b16 %v2016
        %v2033 = vunpack.c.l.b16 %v2017
        %v2034 = vunpack.c.l.b16 %v2018
        %v2035 = vunpack.c.l.b16 %v2019
        %v2036 = vunpack.c.l.b16 %v2020
        %v2037 = vunpack.c.l.b16 %v2021
        %v2038 = vpack.c.b16 %v2031, %v2030
        %v2039 = vpack.c.b16 %v2033, %v2032
        %v2040 = vpack.c.b16 %v2035, %v2034
        %v2041 = vpack.c.b16 %v2037, %v2036
        %vm2046 = vcmask 523264
        %v2048 = vsel %vm2046, %v2010, 0
        %2050 = vmatprep.subr.bf16.mxu0 0
        %2051 = vmatpush1.bf16.msra.mxu0 %v2038
        %2052 = vmatprep.subr.bf16.mxu0 0
        %2053 = vmatpush1.bf16.msra.mxu0 %v2039
        %2054 = vmatprep.subr.bf16.mxu0 0
        %2055 = vmatpush1.bf16.msra.mxu0 %v2040
        %2056 = vmatprep.subr.bf16.mxu0 0
        %2057 = vmatpush1.bf16.msra.mxu0 %v2041
        %2058 = vmatprep.subr.bf16.mxu0 0
        %2059 = vmatpush1.bf16.msra.mxu0 0
        %2060 = vmatprep.subr.bf16.mxu0 0
        %2061 = vmatpush1.bf16.msra.mxu0 0
        %2062 = vmatprep.subr.bf16.mxu0 0
        %2063 = vmatpush1.bf16.msra.mxu0 0
        %2064 = vmatprep.subr.bf16.mxu0 0
        %2065 = vmatpush1.bf16.msra.mxu0 0
        %2066 = vmatprep.subr.bf16.mxu0 0
        %2067 = vmatpush1.bf16.msra.mxu0 0
        %2068 = vmatprep.subr.bf16.mxu0 0
        %2069 = vmatpush1.bf16.msra.mxu0 0
        %2070 = vmatprep.subr.bf16.mxu0 0
        %2071 = vmatpush1.bf16.msra.mxu0 0
        %2072 = vmatprep.subr.bf16.mxu0 0
        %2073 = vmatpush1.bf16.msra.mxu0 0
        %2074 = vmatprep.subr.bf16.mxu0 0
        %2075 = vmatpush1.bf16.msra.mxu0 0
        %2076 = vmatprep.subr.bf16.mxu0 0
        %2077 = vmatpush1.bf16.msra.mxu0 0
        %2078 = vmatprep.subr.bf16.mxu0 0
        %2079 = vmatpush1.bf16.msra.mxu0 0
        %2080 = vmatprep.subr.bf16.mxu0 0
        %2081 = vmatpush1.bf16.msra.mxu0 0
        %2082 = vmatprep.mubr.bf16.mxu0 0
        %2083 = vmatmul.mubr.bf16.gmra.mrb[0].mxu0 %v2048
        %v2084 = vpop.f32.mrb[0].mxu0
        %v2085 = vadd.f32 0.0, %v2084
        %v2086 = vpop.f32.mrb[0].mxu0
        %v2087 = vpop.f32.mrb[0].mxu0
        %v2088 = vpop.f32.mrb[0].mxu0
        %2089 = vdwg.mxu0
        %v2090 = vadd.f32 %v2009, %v2085
        %2091 = vst.msk [vmem:[#allocation2] sm:$0xff] %vm564, %v2090
        %p2092 = scmp.eq.s32.totalorder %s33, 3
        // Predicated region
        $region81: #{tpu_custom_call.1} parent=71 // pred_check
          %p2093 = pneg %p2092
        $region82: #{tpu_custom_call.1} parent=71 // pred_check_branch
          %2095 = sbr.rel (%p2093) target = $region84
        $region83: #{tpu_custom_call.1} parent=71 // pred_region
          %v2096 = vld [vmem:[#allocation2] sm:$0xff]
          %2097 = vst.msk [vmem:[%s501] sm:$0xff] %vm564, %v2096
        $region84: #{tpu_custom_call.1} parent=71 // pred_fallthru
          _
        %s2098 = sand.u32 %s341, 1
        %s2099 = scalar_lea.sflag [#allocation4], %s2098
        %s2100 = sand.u32 %s341, 1
        %s2101 = smul.addr %s2100, 8
        %s2102 = scalar_lea.vmem [#allocation6], %s2101
        // Predicated region
        $region85: #{tpu_custom_call.1} parent=71 // pred_check
          %p2103 = pneg %p351
        $region86: #{tpu_custom_call.1} parent=71 // pred_check_branch
          %2105 = sbr.rel (%p2103) target = $region88
        $region87: #{tpu_custom_call.1} parent=71 // pred_region
          %s2107 = ssub.s32 128, 128
          %2108 = vsyncadd %s2099, %s2107
          %s2109 = smul.addr %s32, 128
          %s2110 = scalar_lea.hbm %s13, %s2109
          %s2112 = sshll.u32 %s2102, 4
          %s2113 = int_to_ptr.vmem [resolvable:$true] %s2112
          %2115 = dma.vmem_to_hbm [thread:$0]  %s2113, 128, %s2110, %s2099
        $region88: #{tpu_custom_call.1} parent=71 // pred_fallthru
          _
      $region72: #{tpu_custom_call.1} parent=5 // pred_fallthru
        _
      %p2116 = scmp.le.s32.totalorder 2, %s23
      // Predicated region
      $region89: #{tpu_custom_call.1} parent=5 // pred_check
        %p2117 = pneg %p2116
      $region90: #{tpu_custom_call.1} parent=5 // pred_check_branch
        %2119 = sbr.rel (%p2117) target = $region92
      $region91: #{tpu_custom_call.1} parent=5 // pred_region
        %s2120 = ssub.s32 %s23, 2
        // Predicated region
        $region93: #{tpu_custom_call.1} parent=91 // pred_check
          %p2121 = pneg %p357
        $region94: #{tpu_custom_call.1} parent=91 // pred_check_branch
          %2123 = sbr.rel (%p2121) target = $region96
        $region95: #{tpu_custom_call.1} parent=91 // pred_region
          %s2124 = sand.u32 %s342, 1
          %s2125 = scalar_lea.sflag [#allocation4], %s2124
          %s2126 = sand.u32 %s342, 1
          %s2127 = smul.addr %s2126, 8
          %s2128 = scalar_lea.vmem [#allocation6], %s2127
          %2129 = dma.done %s2125, 128
        $region96: #{tpu_custom_call.1} parent=91 // pred_fallthru
          _
      $region92: #{tpu_custom_call.1} parent=5 // pred_fallthru
        _
    $region6: #{tpu_custom_call.1} parent=1 // loop_footer
      %s27 = sadd.s32 1, %s23
    $region7: #{tpu_custom_call.1} parent=1 // loop_footer_branch
      %22 = sbr.rel target = $region3
    $region8: #{tpu_custom_call.1} parent=1 // loop_exit
      _
    %2130 = vsyncpa [#allocation4], 1
    %s2131 = scalar_lea.sflag [#allocation4], 1
    %2132 = vsyncpa %s2131, 1
    %2133 = vsyncpa [#allocation5], 1
    %s2134 = scalar_lea.sflag [#allocation5], 1
    %2135 = vsyncpa %s2134, 1

</llo_original>
